<compile_context>
chip_gen: v7x
topology: tpu7x:2x2x1
jax: 0.10.0
libtpu: 0.0.40
codegen_flags: <defaults>
</compile_context>

<pallas_src>
import functools

import jax
import jax.numpy as jnp
from jax.experimental import pallas as pl
from jax.experimental.pallas import tpu as pltpu

FEATURE_DIM = 256
HIDDEN_DIM = 64
FUSED_DIM = 2 * HIDDEN_DIM  # 128: policy half | value half, lane-dense
LN_EPS = 1e-5
_HIGHEST = jax.lax.Precision.HIGHEST  # full-f32 MXU passes for matmuls


def _round_up(x, m):
    return (x + m - 1) // m * m


def _cdiv(a, b):
    return -(-a // b)


@functools.lru_cache(maxsize=1)
def _num_tensorcores():
    """Best-effort TensorCores-per-chip (v7x / megacore: 2, v5e / v6e: 1)."""
    try:
        info = pltpu.get_tpu_info()
        for attr in ("num_cores", "tensor_cores_per_chip", "cores_per_chip",
                     "num_tensorcores"):
            n = getattr(info, attr, None)
            if isinstance(n, int) and n > 0:
                return n
    except Exception:
        pass
    try:
        kind = jax.devices()[0].device_kind.lower()
        if any(tag in kind for tag in ("v7", "7x", "v5p", "v4")):
            return 2
    except Exception:
        pass
    return 1


def _fused_kernel(x_ref, w_ref, g_ref, b_ref, m_ref, o_ref):
    """One tile: fused matmul -> two 64-wide LayerNorms -> exact GELU."""
    # Single MXU matmul feeds both branches: (bb,256)@(256,128) -> (bb,128) f32.
    h = jnp.dot(x_ref[...], w_ref[...],
                preferred_element_type=jnp.float32, precision=_HIGHEST)

    # Per-half mean / biased variance via a block-diagonal averaging matmul:
    # m_ref is (128,128) with two 64x64 blocks of 1/64, so (h @ M)[:, j] is the
    # mean of the 64-wide half that lane j belongs to.  Keeps the epilogue
    # fully (bb,128) lane-dense (no 64-lane slices / concat, no XLU reduce).
    avg = m_ref[...]
    mu = jnp.dot(h, avg, preferred_element_type=jnp.float32, precision=_HIGHEST)
    d = h - mu
    var = jnp.dot(d * d, avg, preferred_element_type=jnp.float32,
                  precision=_HIGHEST)
    hn = d * jax.lax.rsqrt(var + LN_EPS)
    hn = hn * g_ref[...] + b_ref[...]

    # Exact GELU (torch.nn.GELU default): 0.5 * x * (1 + erf(x / sqrt(2))).
    inv_sqrt2 = jnp.float32(0.7071067811865476)
    o_ref[...] = (0.5 * hn * (1.0 + jax.lax.erf(hn * inv_sqrt2))).astype(o_ref.dtype)


def init_params(key):
    """Per-branch params matching the torch module's shapes.

    Linear(256, 64, bias=False): torch weight is (64,256); we store W^T (256,64).
    LayerNorm(64): gamma=ones, beta=zeros (kept 2D as (1,64) for TPU layout).
    """
    kp, kv = jax.random.split(key)
    bound = 1.0 / jnp.sqrt(jnp.float32(FEATURE_DIM))
    wp = jax.random.uniform(kp, (FEATURE_DIM, HIDDEN_DIM), jnp.float32, -bound, bound)
    wv = jax.random.uniform(kv, (FEATURE_DIM, HIDDEN_DIM), jnp.float32, -bound, bound)
    gp = jnp.ones((1, HIDDEN_DIM), jnp.float32)
    bp = jnp.zeros((1, HIDDEN_DIM), jnp.float32)
    gv = jnp.ones((1, HIDDEN_DIM), jnp.float32)
    bv = jnp.zeros((1, HIDDEN_DIM), jnp.float32)
    return {"policy": (wp, gp, bp), "value": (wv, gv, bv)}


def pack_params(params):
    """One-time branch fusion (hoisted out of the per-forward hot path)."""
    wp, gp, bp = params["policy"]
    wv, gv, bv = params["value"]
    half = jnp.arange(FUSED_DIM, dtype=jnp.int32) // HIDDEN_DIM
    ln_avg = (half[:, None] == half[None, :]).astype(jnp.float32) / HIDDEN_DIM
    return {
        "w": jnp.concatenate([wp, wv], axis=1),        # (256, 128)
        "gamma": jnp.concatenate([gp, gv], axis=1),    # (1, 128)
        "beta": jnp.concatenate([bp, bv], axis=1),     # (1, 128)
        "ln_avg": ln_avg,                              # (128, 128) block-diag 1/64
    }


@functools.partial(jax.jit, static_argnames=("block_b", "out_dtype"))
def custom_network_forward_fused(features, packed, *, block_b=2048, out_dtype=None):
    """Fused forward: returns a (B, 128) slab (pi in lanes 0..63, vf in 64..127)."""
    B, F = features.shape
    if F != FEATURE_DIM:
        raise ValueError(f"expected {FEATURE_DIM} features, got {F}")
    out_dtype = features.dtype if out_dtype is None else out_dtype

    # Batch tile: as large as possible (HBM-bound -> amortize the ~0.35us
    # per-grid-step overhead), never larger than the 8-aligned batch.
    bb = max(8, _round_up(min(block_b, _round_up(max(B, 1), 8)), 8))

    # Only force multi-step grids where there are multiple TensorCores to feed
    # (v7x / megacore); on 1-TC chips the grid is a serial loop, so splitting a
    # batch that fits one tile is a pure loss.  Prefer step counts that divide
    # evenly across the cores for load balance.
    ncores = _num_tensorcores()
    if ncores > 1 and B > 8:
        steps = _cdiv(B, bb)
        if steps < ncores:
            bb = max(8, _round_up(_cdiv(B, ncores), 8))
        elif steps % ncores and steps <= 4 * ncores:
            bb = max(8, _round_up(_cdiv(B, _round_up(steps, ncores)), 8))

    grid = (_cdiv(B, bb),)

    # f32 upper-bound VMEM estimate: double-buffered x/out + constant weights.
    vmem_est = 4 * (2 * bb * FEATURE_DIM + 2 * bb * FUSED_DIM
                    + FEATURE_DIM * FUSED_DIM + 2 * FUSED_DIM
                    + FUSED_DIM * FUSED_DIM)
    vmem_limit = None
    if vmem_est > 12 * 1024 * 1024:  # large tile sweeps vs v5e's 16 MiB default
        vmem_limit = int(vmem_est * 5 // 4) + (2 << 20)

    return pl.pallas_call(
        _fused_kernel,
        out_shape=jax.ShapeDtypeStruct((B, FUSED_DIM), out_dtype),
        grid_spec=pltpu.PrefetchScalarGridSpec(
            num_scalar_prefetch=0,
            grid=grid,
            in_specs=[
                pl.BlockSpec((bb, FEATURE_DIM), lambda i: (i, 0)),
                # Constant-index blocks below are DMA'd once (their block index
                # never changes across grid steps).
                pl.BlockSpec((FEATURE_DIM, FUSED_DIM), lambda i: (0, 0)),
                pl.BlockSpec((1, FUSED_DIM), lambda i: (0, 0)),
                pl.BlockSpec((1, FUSED_DIM), lambda i: (0, 0)),
                pl.BlockSpec((FUSED_DIM, FUSED_DIM), lambda i: (0, 0)),
            ],
            out_specs=pl.BlockSpec((bb, FUSED_DIM), lambda i: (i, 0)),
        ),
        compiler_params=pltpu.CompilerParams(
            dimension_semantics=("parallel",),
            vmem_limit_bytes=vmem_limit),
    )(features, packed["w"], packed["gamma"], packed["beta"], packed["ln_avg"])


@functools.partial(jax.jit, static_argnames=("block_b", "out_dtype"))
def custom_network_forward(features, packed, *, block_b=2048, out_dtype=None):
    """API-parity forward: returns (latent_pi, latent_vf), each (B, 64).

    The column split is an extra pass over the output; callers that can consume
    the fused (B,128) layout should use custom_network_forward_fused (or call
    this inside a larger jit so XLA fuses the slices into the consumers).
    """
    out = custom_network_forward_fused(features, packed,
                                       block_b=block_b, out_dtype=out_dtype)
    return out[:, :HIDDEN_DIM], out[:, HIDDEN_DIM:]


def _reference(features, params):
    """Pure-JAX reference (torch semantics: biased LN variance, exact erf GELU)."""
    def branch(x, w, g, b):
        h = jnp.dot(x, w, precision=_HIGHEST)
        mu = jnp.mean(h, axis=-1, keepdims=True)
        var = jnp.mean((h - mu) ** 2, axis=-1, keepdims=True)
        hn = (h - mu) / jnp.sqrt(var + LN_EPS) * g + b
        return jax.nn.gelu(hn, approximate=False)
    wp, gp, bp = params["policy"]
    wv, gv, bv = params["value"]
    return branch(features, wp, gp, bp), branch(features, wv, gv, bv)


if __name__ == "__main__":
    key = jax.random.PRNGKey(0)
    k_feat1, k_feat2, k_params = jax.random.split(key, 3)

    params = init_params(k_params)
    packed = pack_params(params)  # one-time param fusion, outside the hot path

    # Tolerance covers MXU f32-pass differences; real bugs are orders larger.
    ATOL = RTOL = 2e-3

    # Case 1: small batch (smaller than one 8-row tile group).
    B1 = 4
    feats1 = jax.random.normal(k_feat1, (B1, FEATURE_DIM), jnp.float32)
    pi1, vf1 = custom_network_forward(feats1, packed)
    jax.block_until_ready((pi1, vf1))
    rpi1, rvf1 = _reference(feats1, params)
    assert pi1.shape == (B1, HIDDEN_DIM) and vf1.shape == (B1, HIDDEN_DIM)
    assert jnp.allclose(pi1, rpi1, atol=ATOL, rtol=RTOL)
    assert jnp.allclose(vf1, rvf1, atol=ATOL, rtol=RTOL)

    # Case 2: batch not a multiple of 8 -> exercises the ragged last block
    # (no wrapper-side padding; Pallas masks the out-of-bounds rows on store).
    B2 = 13
    feats2 = jax.random.normal(k_feat2, (B2, FEATURE_DIM), jnp.float32)
    pi2, vf2 = custom_network_forward(feats2, packed)
    jax.block_until_ready((pi2, vf2))
    rpi2, rvf2 = _reference(feats2, params)
    assert pi2.shape == (B2, HIDDEN_DIM) and vf2.shape == (B2, HIDDEN_DIM)
    assert jnp.allclose(pi2, rpi2, atol=ATOL, rtol=RTOL)
    assert jnp.allclose(vf2, rvf2, atol=ATOL, rtol=RTOL)

    # Fused (B,128) output path (no extra column-split pass) also runs clean.
    fused = custom_network_forward_fused(feats2, packed)
    jax.block_until_ready(fused)
    assert fused.shape == (B2, FUSED_DIM)
    assert jnp.allclose(fused, jnp.concatenate([pi2, vf2], axis=1), atol=1e-6)

    print("KERNEL_OK")
</pallas_src>

<mosaic_0001>
module attributes {stable_mosaic.version = 11 : i64} {
  func.func @_fused_kernel(%arg0: i32, %arg1: memref<8x256xf32, #tpu.memory_space<vmem>>, %arg2: memref<256x128xf32, #tpu.memory_space<vmem>>, %arg3: memref<1x128xf32, #tpu.memory_space<vmem>>, %arg4: memref<1x128xf32, #tpu.memory_space<vmem>>, %arg5: memref<128x128xf32, #tpu.memory_space<vmem>>, %arg6: memref<8x128xf32, #tpu.memory_space<vmem>>) attributes {dimension_semantics = [#tpu.dimension_semantics<parallel>], iteration_bounds = array<i64: 1>, scalar_prefetch = 0 : i64, scratch_operands = 0 : i64, tpu.core_type = #tpu.core_type<tc>, window_params = [{transform_indices = @transform_0, window_bounds = array<i64: 8, 256>}, {pipeline_mode = #tpu.pipeline_mode<synchronous>, transform_indices = @transform_1, window_bounds = array<i64: 256, 128>}, {pipeline_mode = #tpu.pipeline_mode<synchronous>, transform_indices = @transform_2, window_bounds = array<i64: 1, 128>}, {pipeline_mode = #tpu.pipeline_mode<synchronous>, transform_indices = @transform_3, window_bounds = array<i64: 1, 128>}, {pipeline_mode = #tpu.pipeline_mode<synchronous>, transform_indices = @transform_4, window_bounds = array<i64: 128, 128>}, {transform_indices = @transform_5, window_bounds = array<i64: 8, 128>}]} {
    %c0 = arith.constant 0 : index
    %c0_0 = arith.constant 0 : index
    %0 = vector.load %arg1[%c0, %c0_0] : memref<8x256xf32, #tpu.memory_space<vmem>>, vector<8x256xf32>
    %c0_1 = arith.constant 0 : index
    %c0_2 = arith.constant 0 : index
    %1 = vector.load %arg2[%c0_1, %c0_2] : memref<256x128xf32, #tpu.memory_space<vmem>>, vector<256x128xf32>
    %cst = arith.constant dense<0.000000e+00> : vector<8x128xf32>
    %2 = tpu.matmul %0, %1, %cst {dimension_numbers = #tpu.dot_dimension_numbers<[1], [0], [0], [1], [0, 0, 1, 1], [], []>, precision = #tpu.contract_precision<fp32>} : vector<8x256xf32>, vector<256x128xf32>, vector<8x128xf32> -> vector<8x128xf32>
    %c0_3 = arith.constant 0 : index
    %c0_4 = arith.constant 0 : index
    %3 = vector.load %arg5[%c0_3, %c0_4] : memref<128x128xf32, #tpu.memory_space<vmem>>, vector<128x128xf32>
    %cst_5 = arith.constant dense<0.000000e+00> : vector<8x128xf32>
    %4 = tpu.matmul %2, %3, %cst_5 {dimension_numbers = #tpu.dot_dimension_numbers<[1], [0], [0], [1], [0, 0, 1, 1], [], []>, precision = #tpu.contract_precision<fp32>} : vector<8x128xf32>, vector<128x128xf32>, vector<8x128xf32> -> vector<8x128xf32>
    %5 = arith.subf %2, %4 : vector<8x128xf32>
    %6 = arith.mulf %5, %5 : vector<8x128xf32>
    %cst_6 = arith.constant dense<0.000000e+00> : vector<8x128xf32>
    %7 = tpu.matmul %6, %3, %cst_6 {dimension_numbers = #tpu.dot_dimension_numbers<[1], [0], [0], [1], [0, 0, 1, 1], [], []>, precision = #tpu.contract_precision<fp32>} : vector<8x128xf32>, vector<128x128xf32>, vector<8x128xf32> -> vector<8x128xf32>
    %cst_7 = arith.constant 9.99999974E-6 : f32
    %8 = vector.broadcast %cst_7 : f32 to vector<8x128xf32>
    %9 = arith.addf %7, %8 : vector<8x128xf32>
    %10 = math.rsqrt %9 : vector<8x128xf32>
    %11 = arith.mulf %5, %10 : vector<8x128xf32>
    %c0_8 = arith.constant 0 : index
    %c0_9 = arith.constant 0 : index
    %12 = vector.load %arg3[%c0_8, %c0_9] : memref<1x128xf32, #tpu.memory_space<vmem>>, vector<1x128xf32>
    %13 = vector.broadcast %12 : vector<1x128xf32> to vector<8x128xf32>
    %14 = arith.mulf %11, %13 : vector<8x128xf32>
    %c0_10 = arith.constant 0 : index
    %c0_11 = arith.constant 0 : index
    %15 = vector.load %arg4[%c0_10, %c0_11] : memref<1x128xf32, #tpu.memory_space<vmem>>, vector<1x128xf32>
    %16 = vector.broadcast %15 : vector<1x128xf32> to vector<8x128xf32>
    %17 = arith.addf %14, %16 : vector<8x128xf32>
    %cst_12 = arith.constant 5.000000e-01 : f32
    %18 = vector.broadcast %cst_12 : f32 to vector<8x128xf32>
    %19 = arith.mulf %18, %17 : vector<8x128xf32>
    %cst_13 = arith.constant 0.707106769 : f32
    %20 = vector.broadcast %cst_13 : f32 to vector<8x128xf32>
    %21 = arith.mulf %17, %20 : vector<8x128xf32>
    %22 = math.erf %21 : vector<8x128xf32>
    %cst_14 = arith.constant 1.000000e+00 : f32
    %23 = vector.broadcast %cst_14 : f32 to vector<8x128xf32>
    %24 = arith.addf %23, %22 : vector<8x128xf32>
    %25 = arith.mulf %19, %24 : vector<8x128xf32>
    %c0_15 = arith.constant 0 : index
    %c0_16 = arith.constant 0 : index
    %26 = vector.load %arg6[%c0_15, %c0_16] : memref<8x128xf32, #tpu.memory_space<vmem>>, vector<8x128xf32>
    tpu.vector_store %arg6[%c0_15, %c0_16], %25 {strides = array<i32>} : memref<8x128xf32, #tpu.memory_space<vmem>>, vector<8x128xf32>,
    return
  }
  func.func @transform_0(%arg0: i32) -> (i32, i32) {
    %c0_i32 = arith.constant 0 : i32
    %c0_i32_0 = arith.constant 0 : i32
    return %arg0, %c0_i32 : i32, i32
  }
  func.func @transform_1(%arg0: i32) -> (i32, i32) {
    %c0_i32 = arith.constant 0 : i32
    %c0_i32_0 = arith.constant 0 : i32
    %c0_i32_1 = arith.constant 0 : i32
    return %c0_i32, %c0_i32_0 : i32, i32
  }
  func.func @transform_2(%arg0: i32) -> (i32, i32) {
    %c0_i32 = arith.constant 0 : i32
    %c0_i32_0 = arith.constant 0 : i32
    %c0_i32_1 = arith.constant 0 : i32
    return %c0_i32, %c0_i32_0 : i32, i32
  }
  func.func @transform_3(%arg0: i32) -> (i32, i32) {
    %c0_i32 = arith.constant 0 : i32
    %c0_i32_0 = arith.constant 0 : i32
    %c0_i32_1 = arith.constant 0 : i32
    return %c0_i32, %c0_i32_0 : i32, i32
  }
  func.func @transform_4(%arg0: i32) -> (i32, i32) {
    %c0_i32 = arith.constant 0 : i32
    %c0_i32_0 = arith.constant 0 : i32
    %c0_i32_1 = arith.constant 0 : i32
    return %c0_i32, %c0_i32_0 : i32, i32
  }
  func.func @transform_5(%arg0: i32) -> (i32, i32) {
    %c0_i32 = arith.constant 0 : i32
    %c0_i32_0 = arith.constant 0 : i32
    return %arg0, %c0_i32 : i32, i32
  }
}

</mosaic_0001>

<llo_original>
// kernel: custom_network_forward_fused.1
$region0: #{custom_network_forward_fused.1}
  #allocation0 [shape = 'u32[]', space=smem, size = 0x4, offset = 0x4, fixed_abs, tag = 'smem constant byte address 0x4 - core index']
  #allocation1 [shape = 'u32[144,128]{1,0:T(1,128)}', space=vmem, size = 0x12000, scoped, tag = 'internal scratch']
  %s0 = inlined_call_operand.hbm [shape: f32[4,256], index: 0, kind: input, shape index: {}]
  %s1 = inlined_call_operand.hbm [shape: f32[256,128], index: 1, kind: input, shape index: {}]
  %s2 = inlined_call_operand.vmem [shape: f32[1,128], index: 2, kind: input, shape index: {}]
  %s3 = inlined_call_operand.vmem [shape: f32[1,128], index: 3, kind: input, shape index: {}]
  %s4 = inlined_call_operand.hbm [shape: f32[128,128], index: 4, kind: input, shape index: {}]
  %s5 = inlined_call_operand.hbm [shape: f32[4,128], index: 5, kind: output, shape index: {}]
  %s6 = sld [smem:[#allocation0]]
  $region42: #{custom_network_forward_fused.1} parent=0
    _
  %s8 = ssub.s32 1, %s6
  %s9 = scalar_select 0, %s8, %s6
  $region1: #{custom_network_forward_fused.1} parent=0
    #allocation2 [shape = 'u8[8192]{0}', space=vmem, size = 0x2000, scoped, tag = 'input window, operand 0, single buffered']
    #allocation3 [shape = 's32[1]{0}', space=sflag, size = 0x4, scoped, tag = 'scoped memory for custom_network_forward_fused.1']
    #allocation4 [shape = 's32[1]{0}', space=sflag, size = 0x4, scoped, tag = 'scoped memory for custom_network_forward_fused.1']
    #allocation5 [shape = 'u8[131072]{0}', space=vmem, size = 0x20000, scoped, tag = 'input window, operand 1, single buffered']
    #allocation6 [shape = 's32[1]{0}', space=sflag, size = 0x4, scoped, tag = 'scoped memory for custom_network_forward_fused.1']
    #allocation7 [shape = 'u8[65536]{0}', space=vmem, size = 0x10000, scoped, tag = 'input window, operand 4, single buffered']
    #allocation8 [shape = 'u8[4096]{0}', space=vmem, size = 0x1000, scoped, tag = 'output window, operand 0, single buffered']
    %10 = vsyncpa [#allocation3], 0
    %11 = vsyncpa [#allocation6], 0
    %12 = vsyncpa [#allocation4], 0
    // Predicated region
    $region2: #{custom_network_forward_fused.1} parent=1 // pred_check
      _
    $region3: #{custom_network_forward_fused.1} parent=1 // pred_check_branch
      %14 = sbr.rel (0) target = $region5
    $region4: #{custom_network_forward_fused.1} parent=1 // pred_region
      %s16 = ssub.s32 256, 128
      %17 = vsyncadd [#allocation3], %s16
      %s18 = sshll.u32 [#allocation2], 4
      %s19 = int_to_ptr.vmem [resolvable:$true] %s18
      %24 = dma.hbm_to_vmem [thread:$0]  %s0, 128, %s19, [#allocation3], 128, 128, 8
    $region5: #{custom_network_forward_fused.1} parent=1 // pred_fallthru
      _
    // Predicated region
    $region6: #{custom_network_forward_fused.1} parent=1 // pred_check
      _
    $region7: #{custom_network_forward_fused.1} parent=1 // pred_check_branch
      %26 = sbr.rel (0) target = $region9
    $region8: #{custom_network_forward_fused.1} parent=1 // pred_region
      %s28 = ssub.s32 4096, 4096
      %29 = vsyncadd [#allocation6], %s28
      %s30 = sshll.u32 [#allocation5], 4
      %s31 = int_to_ptr.vmem [resolvable:$true] %s30
      %36 = dma.hbm_to_vmem [thread:$0]  %s1, 4096, %s31, [#allocation6], 128, 128, 8
    $region9: #{custom_network_forward_fused.1} parent=1 // pred_fallthru
      _
    // Predicated region
    $region10: #{custom_network_forward_fused.1} parent=1 // pred_check
      _
    $region11: #{custom_network_forward_fused.1} parent=1 // pred_check_branch
      %38 = sbr.rel (0) target = $region13
    $region12: #{custom_network_forward_fused.1} parent=1 // pred_region
      _
    $region13: #{custom_network_forward_fused.1} parent=1 // pred_fallthru
      _
    // Predicated region
    $region14: #{custom_network_forward_fused.1} parent=1 // pred_check
      _
    $region15: #{custom_network_forward_fused.1} parent=1 // pred_check_branch
      %40 = sbr.rel (0) target = $region17
    $region16: #{custom_network_forward_fused.1} parent=1 // pred_region
      _
    $region17: #{custom_network_forward_fused.1} parent=1 // pred_fallthru
      _
    // Predicated region
    $region18: #{custom_network_forward_fused.1} parent=1 // pred_check
      _
    $region19: #{custom_network_forward_fused.1} parent=1 // pred_check_branch
      %42 = sbr.rel (0) target = $region21
    $region20: #{custom_network_forward_fused.1} parent=1 // pred_region
      %s44 = ssub.s32 2048, 2048
      %45 = vsyncadd [#allocation6], %s44
      %s46 = sshll.u32 [#allocation7], 4
      %s47 = int_to_ptr.vmem [resolvable:$true] %s46
      %52 = dma.hbm_to_vmem [thread:$0]  %s4, 2048, %s47, [#allocation6], 128, 128, 8
    $region21: #{custom_network_forward_fused.1} parent=1 // pred_fallthru
      _
    // Predicated region
    $region22: #{custom_network_forward_fused.1} parent=1 // pred_check
      _
    $region23: #{custom_network_forward_fused.1} parent=1 // pred_check_branch
      %54 = sbr.rel (0) target = $region25
    $region24: #{custom_network_forward_fused.1} parent=1 // pred_region
      %55 = dma.done [#allocation3], 256
    $region25: #{custom_network_forward_fused.1} parent=1 // pred_fallthru
      _
    // Predicated region
    $region26: #{custom_network_forward_fused.1} parent=1 // pred_check
      _
    $region27: #{custom_network_forward_fused.1} parent=1 // pred_check_branch
      %57 = sbr.rel (0) target = $region29
    $region28: #{custom_network_forward_fused.1} parent=1 // pred_region
      %58 = dma.done [#allocation6], 4096
    $region29: #{custom_network_forward_fused.1} parent=1 // pred_fallthru
      _
    // Predicated region
    $region30: #{custom_network_forward_fused.1} parent=1 // pred_check
      _
    $region31: #{custom_network_forward_fused.1} parent=1 // pred_check_branch
      %60 = sbr.rel (0) target = $region33
    $region32: #{custom_network_forward_fused.1} parent=1 // pred_region
      %61 = dma.done [#allocation6], 2048
    $region33: #{custom_network_forward_fused.1} parent=1 // pred_fallthru
      _
    %v62 = vld [vmem:[#allocation2] sm:$0xff]
    %v63 = vld [vmem:[#allocation2 + $0x8] sm:$0xff]
    %v64 = vld [vmem:[#allocation5] sm:$0xff]
    %v65 = vld [vmem:[#allocation5 + $0x8] sm:$0xff]
    %v66 = vld [vmem:[#allocation5 + $0x10] sm:$0xff]
    %v67 = vld [vmem:[#allocation5 + $0x18] sm:$0xff]
    %v68 = vld [vmem:[#allocation5 + $0x20] sm:$0xff]
    %v69 = vld [vmem:[#allocation5 + $0x28] sm:$0xff]
    %v70 = vld [vmem:[#allocation5 + $0x30] sm:$0xff]
    %v71 = vld [vmem:[#allocation5 + $0x38] sm:$0xff]
    %v72 = vld [vmem:[#allocation5 + $0x40] sm:$0xff]
    %v73 = vld [vmem:[#allocation5 + $0x48] sm:$0xff]
    %v74 = vld [vmem:[#allocation5 + $0x50] sm:$0xff]
    %v75 = vld [vmem:[#allocation5 + $0x58] sm:$0xff]
    %v76 = vld [vmem:[#allocation5 + $0x60] sm:$0xff]
    %v77 = vld [vmem:[#allocation5 + $0x68] sm:$0xff]
    %v78 = vld [vmem:[#allocation5 + $0x70] sm:$0xff]
    %v79 = vld [vmem:[#allocation5 + $0x78] sm:$0xff]
    %v80 = vld [vmem:[#allocation5 + $0x80] sm:$0xff]
    %v81 = vld [vmem:[#allocation5 + $0x88] sm:$0xff]
    %v82 = vld [vmem:[#allocation5 + $0x90] sm:$0xff]
    %v83 = vld [vmem:[#allocation5 + $0x98] sm:$0xff]
    %v84 = vld [vmem:[#allocation5 + $0xa0] sm:$0xff]
    %v85 = vld [vmem:[#allocation5 + $0xa8] sm:$0xff]
    %v86 = vld [vmem:[#allocation5 + $0xb0] sm:$0xff]
    %v87 = vld [vmem:[#allocation5 + $0xb8] sm:$0xff]
    %v88 = vld [vmem:[#allocation5 + $0xc0] sm:$0xff]
    %v89 = vld [vmem:[#allocation5 + $0xc8] sm:$0xff]
    %v90 = vld [vmem:[#allocation5 + $0xd0] sm:$0xff]
    %v91 = vld [vmem:[#allocation5 + $0xd8] sm:$0xff]
    %v92 = vld [vmem:[#allocation5 + $0xe0] sm:$0xff]
    %v93 = vld [vmem:[#allocation5 + $0xe8] sm:$0xff]
    %v94 = vld [vmem:[#allocation5 + $0xf0] sm:$0xff]
    %v95 = vld [vmem:[#allocation5 + $0xf8] sm:$0xff]
    %v98 = vcombine.low %v62, %v63
    %v99 = vcombine.high %v62, %v63
    %102 = vmatprep.subr.mxu0 0.0
    %v103 = vand.u32 %v64, 4294901760
    %104 = vmatpush1.msra.mxu0 %v103
    %105 = vmatprep.subr.mxu0 0.0
    %v106 = vand.u32 %v65, 4294901760
    %107 = vmatpush1.msra.mxu0 %v106
    %108 = vmatprep.subr.mxu0 0.0
    %v109 = vand.u32 %v66, 4294901760
    %110 = vmatpush1.msra.mxu0 %v109
    %111 = vmatprep.subr.mxu0 0.0
    %v112 = vand.u32 %v67, 4294901760
    %113 = vmatpush1.msra.mxu0 %v112
    %114 = vmatprep.subr.mxu0 0.0
    %v115 = vand.u32 %v68, 4294901760
    %116 = vmatpush1.msra.mxu0 %v115
    %117 = vmatprep.subr.mxu0 0.0
    %v118 = vand.u32 %v69, 4294901760
    %119 = vmatpush1.msra.mxu0 %v118
    %120 = vmatprep.subr.mxu0 0.0
    %v121 = vand.u32 %v70, 4294901760
    %122 = vmatpush1.msra.mxu0 %v121
    %123 = vmatprep.subr.mxu0 0.0
    %v124 = vand.u32 %v71, 4294901760
    %125 = vmatpush1.msra.mxu0 %v124
    %126 = vmatprep.subr.mxu0 0.0
    %v127 = vand.u32 %v72, 4294901760
    %128 = vmatpush1.msra.mxu0 %v127
    %129 = vmatprep.subr.mxu0 0.0
    %v130 = vand.u32 %v73, 4294901760
    %131 = vmatpush1.msra.mxu0 %v130
    %132 = vmatprep.subr.mxu0 0.0
    %v133 = vand.u32 %v74, 4294901760
    %134 = vmatpush1.msra.mxu0 %v133
    %135 = vmatprep.subr.mxu0 0.0
    %v136 = vand.u32 %v75, 4294901760
    %137 = vmatpush1.msra.mxu0 %v136
    %138 = vmatprep.subr.mxu0 0.0
    %v139 = vand.u32 %v76, 4294901760
    %140 = vmatpush1.msra.mxu0 %v139
    %141 = vmatprep.subr.mxu0 0.0
    %v142 = vand.u32 %v77, 4294901760
    %143 = vmatpush1.msra.mxu0 %v142
    %144 = vmatprep.subr.mxu0 0.0
    %v145 = vand.u32 %v78, 4294901760
    %146 = vmatpush1.msra.mxu0 %v145
    %147 = vmatprep.subr.mxu0 0.0
    %v148 = vand.u32 %v79, 4294901760
    %149 = vmatpush1.msra.mxu0 %v148
    %150 = vmatprep.subr.mxu0 0.0
    %v151 = vand.u32 %v80, 4294901760
    %152 = vmatpush1.msra.mxu0 %v151
    %153 = vmatprep.subr.mxu0 0.0
    %v154 = vand.u32 %v81, 4294901760
    %155 = vmatpush1.msra.mxu0 %v154
    %156 = vmatprep.subr.mxu0 0.0
    %v157 = vand.u32 %v82, 4294901760
    %158 = vmatpush1.msra.mxu0 %v157
    %159 = vmatprep.subr.mxu0 0.0
    %v160 = vand.u32 %v83, 4294901760
    %161 = vmatpush1.msra.mxu0 %v160
    %162 = vmatprep.subr.mxu0 0.0
    %v163 = vand.u32 %v84, 4294901760
    %164 = vmatpush1.msra.mxu0 %v163
    %165 = vmatprep.subr.mxu0 0.0
    %v166 = vand.u32 %v85, 4294901760
    %167 = vmatpush1.msra.mxu0 %v166
    %168 = vmatprep.subr.mxu0 0.0
    %v169 = vand.u32 %v86, 4294901760
    %170 = vmatpush1.msra.mxu0 %v169
    %171 = vmatprep.subr.mxu0 0.0
    %v172 = vand.u32 %v87, 4294901760
    %173 = vmatpush1.msra.mxu0 %v172
    %174 = vmatprep.subr.mxu0 0.0
    %v175 = vand.u32 %v88, 4294901760
    %176 = vmatpush1.msra.mxu0 %v175
    %177 = vmatprep.subr.mxu0 0.0
    %v178 = vand.u32 %v89, 4294901760
    %179 = vmatpush1.msra.mxu0 %v178
    %180 = vmatprep.subr.mxu0 0.0
    %v181 = vand.u32 %v90, 4294901760
    %182 = vmatpush1.msra.mxu0 %v181
    %183 = vmatprep.subr.mxu0 0.0
    %v184 = vand.u32 %v91, 4294901760
    %185 = vmatpush1.msra.mxu0 %v184
    %186 = vmatprep.subr.mxu0 0.0
    %v187 = vand.u32 %v92, 4294901760
    %188 = vmatpush1.msra.mxu0 %v187
    %189 = vmatprep.subr.mxu0 0.0
    %v190 = vand.u32 %v93, 4294901760
    %191 = vmatpush1.msra.mxu0 %v190
    %192 = vmatprep.subr.mxu0 0.0
    %v193 = vand.u32 %v94, 4294901760
    %194 = vmatpush1.msra.mxu0 %v193
    %195 = vmatprep.subr.mxu0 0.0
    %v196 = vand.u32 %v95, 4294901760
    %197 = vmatpush1.msra.mxu0 %v196
    %v198 = vand.u32 %v99, 4294901760
    %v199 = vsub.f32 %v99, %v198
    %v200 = vand.u32 %v199, 4294901760
    %v201 = vsub.f32 %v199, %v200
    %v202 = vand.u32 %v201, 4294901760
    %203 = vmatprep.mubr.f32.mxu0 %v202
    %v204 = vand.u32 %v98, 4294901760
    %v205 = vsub.f32 %v98, %v204
    %v206 = vand.u32 %v205, 4294901760
    %v207 = vsub.f32 %v205, %v206
    %v208 = vand.u32 %v207, 4294901760
    %209 = vmatmul.mubr.f32.gmra.mrb[0].mxu0 %v208
    %v210 = vpop.f32.mrb[0].mxu0
    %v211 = vadd.f32 0.0, %v210
    %v212 = vpop.f32.mrb[0].mxu0
    %213 = vdwg.mxu0
    %214 = vmatprep.subr.mxu0 0.0
    %v215 = vand.u32 %v64, 4294901760
    %v216 = vsub.f32 %v64, %v215
    %v217 = vand.u32 %v216, 4294901760
    %v218 = vsub.f32 %v216, %v217
    %v219 = vand.u32 %v218, 4294901760
    %220 = vmatpush1.msra.mxu0 %v219
    %221 = vmatprep.subr.mxu0 0.0
    %v222 = vand.u32 %v65, 4294901760
    %v223 = vsub.f32 %v65, %v222
    %v224 = vand.u32 %v223, 4294901760
    %v225 = vsub.f32 %v223, %v224
    %v226 = vand.u32 %v225, 4294901760
    %227 = vmatpush1.msra.mxu0 %v226
    %228 = vmatprep.subr.mxu0 0.0
    %v229 = vand.u32 %v66, 4294901760
    %v230 = vsub.f32 %v66, %v229
    %v231 = vand.u32 %v230, 4294901760
    %v232 = vsub.f32 %v230, %v231
    %v233 = vand.u32 %v232, 4294901760
    %234 = vmatpush1.msra.mxu0 %v233
    %235 = vmatprep.subr.mxu0 0.0
    %v236 = vand.u32 %v67, 4294901760
    %v237 = vsub.f32 %v67, %v236
    %v238 = vand.u32 %v237, 4294901760
    %v239 = vsub.f32 %v237, %v238
    %v240 = vand.u32 %v239, 4294901760
    %241 = vmatpush1.msra.mxu0 %v240
    %242 = vmatprep.subr.mxu0 0.0
    %v243 = vand.u32 %v68, 4294901760
    %v244 = vsub.f32 %v68, %v243
    %v245 = vand.u32 %v244, 4294901760
    %v246 = vsub.f32 %v244, %v245
    %v247 = vand.u32 %v246, 4294901760
    %248 = vmatpush1.msra.mxu0 %v247
    %249 = vmatprep.subr.mxu0 0.0
    %v250 = vand.u32 %v69, 4294901760
    %v251 = vsub.f32 %v69, %v250
    %v252 = vand.u32 %v251, 4294901760
    %v253 = vsub.f32 %v251, %v252
    %v254 = vand.u32 %v253, 4294901760
    %255 = vmatpush1.msra.mxu0 %v254
    %256 = vmatprep.subr.mxu0 0.0
    %v257 = vand.u32 %v70, 4294901760
    %v258 = vsub.f32 %v70, %v257
    %v259 = vand.u32 %v258, 4294901760
    %v260 = vsub.f32 %v258, %v259
    %v261 = vand.u32 %v260, 4294901760
    %262 = vmatpush1.msra.mxu0 %v261
    %263 = vmatprep.subr.mxu0 0.0
    %v264 = vand.u32 %v71, 4294901760
    %v265 = vsub.f32 %v71, %v264
    %v266 = vand.u32 %v265, 4294901760
    %v267 = vsub.f32 %v265, %v266
    %v268 = vand.u32 %v267, 4294901760
    %269 = vmatpush1.msra.mxu0 %v268
    %270 = vmatprep.subr.mxu0 0.0
    %v271 = vand.u32 %v72, 4294901760
    %v272 = vsub.f32 %v72, %v271
    %v273 = vand.u32 %v272, 4294901760
    %v274 = vsub.f32 %v272, %v273
    %v275 = vand.u32 %v274, 4294901760
    %276 = vmatpush1.msra.mxu0 %v275
    %277 = vmatprep.subr.mxu0 0.0
    %v278 = vand.u32 %v73, 4294901760
    %v279 = vsub.f32 %v73, %v278
    %v280 = vand.u32 %v279, 4294901760
    %v281 = vsub.f32 %v279, %v280
    %v282 = vand.u32 %v281, 4294901760
    %283 = vmatpush1.msra.mxu0 %v282
    %284 = vmatprep.subr.mxu0 0.0
    %v285 = vand.u32 %v74, 4294901760
    %v286 = vsub.f32 %v74, %v285
    %v287 = vand.u32 %v286, 4294901760
    %v288 = vsub.f32 %v286, %v287
    %v289 = vand.u32 %v288, 4294901760
    %290 = vmatpush1.msra.mxu0 %v289
    %291 = vmatprep.subr.mxu0 0.0
    %v292 = vand.u32 %v75, 4294901760
    %v293 = vsub.f32 %v75, %v292
    %v294 = vand.u32 %v293, 4294901760
    %v295 = vsub.f32 %v293, %v294
    %v296 = vand.u32 %v295, 4294901760
    %297 = vmatpush1.msra.mxu0 %v296
    %298 = vmatprep.subr.mxu0 0.0
    %v299 = vand.u32 %v76, 4294901760
    %v300 = vsub.f32 %v76, %v299
    %v301 = vand.u32 %v300, 4294901760
    %v302 = vsub.f32 %v300, %v301
    %v303 = vand.u32 %v302, 4294901760
    %304 = vmatpush1.msra.mxu0 %v303
    %305 = vmatprep.subr.mxu0 0.0
    %v306 = vand.u32 %v77, 4294901760
    %v307 = vsub.f32 %v77, %v306
    %v308 = vand.u32 %v307, 4294901760
    %v309 = vsub.f32 %v307, %v308
    %v310 = vand.u32 %v309, 4294901760
    %311 = vmatpush1.msra.mxu0 %v310
    %312 = vmatprep.subr.mxu0 0.0
    %v313 = vand.u32 %v78, 4294901760
    %v314 = vsub.f32 %v78, %v313
    %v315 = vand.u32 %v314, 4294901760
    %v316 = vsub.f32 %v314, %v315
    %v317 = vand.u32 %v316, 4294901760
    %318 = vmatpush1.msra.mxu0 %v317
    %319 = vmatprep.subr.mxu0 0.0
    %v320 = vand.u32 %v79, 4294901760
    %v321 = vsub.f32 %v79, %v320
    %v322 = vand.u32 %v321, 4294901760
    %v323 = vsub.f32 %v321, %v322
    %v324 = vand.u32 %v323, 4294901760
    %325 = vmatpush1.msra.mxu0 %v324
    %326 = vmatprep.subr.mxu0 0.0
    %v327 = vand.u32 %v80, 4294901760
    %v328 = vsub.f32 %v80, %v327
    %v329 = vand.u32 %v328, 4294901760
    %v330 = vsub.f32 %v328, %v329
    %v331 = vand.u32 %v330, 4294901760
    %332 = vmatpush1.msra.mxu0 %v331
    %333 = vmatprep.subr.mxu0 0.0
    %v334 = vand.u32 %v81, 4294901760
    %v335 = vsub.f32 %v81, %v334
    %v336 = vand.u32 %v335, 4294901760
    %v337 = vsub.f32 %v335, %v336
    %v338 = vand.u32 %v337, 4294901760
    %339 = vmatpush1.msra.mxu0 %v338
    %340 = vmatprep.subr.mxu0 0.0
    %v341 = vand.u32 %v82, 4294901760
    %v342 = vsub.f32 %v82, %v341
    %v343 = vand.u32 %v342, 4294901760
    %v344 = vsub.f32 %v342, %v343
    %v345 = vand.u32 %v344, 4294901760
    %346 = vmatpush1.msra.mxu0 %v345
    %347 = vmatprep.subr.mxu0 0.0
    %v348 = vand.u32 %v83, 4294901760
    %v349 = vsub.f32 %v83, %v348
    %v350 = vand.u32 %v349, 4294901760
    %v351 = vsub.f32 %v349, %v350
    %v352 = vand.u32 %v351, 4294901760
    %353 = vmatpush1.msra.mxu0 %v352
    %354 = vmatprep.subr.mxu0 0.0
    %v355 = vand.u32 %v84, 4294901760
    %v356 = vsub.f32 %v84, %v355
    %v357 = vand.u32 %v356, 4294901760
    %v358 = vsub.f32 %v356, %v357
    %v359 = vand.u32 %v358, 4294901760
    %360 = vmatpush1.msra.mxu0 %v359
    %361 = vmatprep.subr.mxu0 0.0
    %v362 = vand.u32 %v85, 4294901760
    %v363 = vsub.f32 %v85, %v362
    %v364 = vand.u32 %v363, 4294901760
    %v365 = vsub.f32 %v363, %v364
    %v366 = vand.u32 %v365, 4294901760
    %367 = vmatpush1.msra.mxu0 %v366
    %368 = vmatprep.subr.mxu0 0.0
    %v369 = vand.u32 %v86, 4294901760
    %v370 = vsub.f32 %v86, %v369
    %v371 = vand.u32 %v370, 4294901760
    %v372 = vsub.f32 %v370, %v371
    %v373 = vand.u32 %v372, 4294901760
    %374 = vmatpush1.msra.mxu0 %v373
    %375 = vmatprep.subr.mxu0 0.0
    %v376 = vand.u32 %v87, 4294901760
    %v377 = vsub.f32 %v87, %v376
    %v378 = vand.u32 %v377, 4294901760
    %v379 = vsub.f32 %v377, %v378
    %v380 = vand.u32 %v379, 4294901760
    %381 = vmatpush1.msra.mxu0 %v380
    %382 = vmatprep.subr.mxu0 0.0
    %v383 = vand.u32 %v88, 4294901760
    %v384 = vsub.f32 %v88, %v383
    %v385 = vand.u32 %v384, 4294901760
    %v386 = vsub.f32 %v384, %v385
    %v387 = vand.u32 %v386, 4294901760
    %388 = vmatpush1.msra.mxu0 %v387
    %389 = vmatprep.subr.mxu0 0.0
    %v390 = vand.u32 %v89, 4294901760
    %v391 = vsub.f32 %v89, %v390
    %v392 = vand.u32 %v391, 4294901760
    %v393 = vsub.f32 %v391, %v392
    %v394 = vand.u32 %v393, 4294901760
    %395 = vmatpush1.msra.mxu0 %v394
    %396 = vmatprep.subr.mxu0 0.0
    %v397 = vand.u32 %v90, 4294901760
    %v398 = vsub.f32 %v90, %v397
    %v399 = vand.u32 %v398, 4294901760
    %v400 = vsub.f32 %v398, %v399
    %v401 = vand.u32 %v400, 4294901760
    %402 = vmatpush1.msra.mxu0 %v401
    %403 = vmatprep.subr.mxu0 0.0
    %v404 = vand.u32 %v91, 4294901760
    %v405 = vsub.f32 %v91, %v404
    %v406 = vand.u32 %v405, 4294901760
    %v407 = vsub.f32 %v405, %v406
    %v408 = vand.u32 %v407, 4294901760
    %409 = vmatpush1.msra.mxu0 %v408
    %410 = vmatprep.subr.mxu0 0.0
    %v411 = vand.u32 %v92, 4294901760
    %v412 = vsub.f32 %v92, %v411
    %v413 = vand.u32 %v412, 4294901760
    %v414 = vsub.f32 %v412, %v413
    %v415 = vand.u32 %v414, 4294901760
    %416 = vmatpush1.msra.mxu0 %v415
    %417 = vmatprep.subr.mxu0 0.0
    %v418 = vand.u32 %v93, 4294901760
    %v419 = vsub.f32 %v93, %v418
    %v420 = vand.u32 %v419, 4294901760
    %v421 = vsub.f32 %v419, %v420
    %v422 = vand.u32 %v421, 4294901760
    %423 = vmatpush1.msra.mxu0 %v422
    %424 = vmatprep.subr.mxu0 0.0
    %v425 = vand.u32 %v94, 4294901760
    %v426 = vsub.f32 %v94, %v425
    %v427 = vand.u32 %v426, 4294901760
    %v428 = vsub.f32 %v426, %v427
    %v429 = vand.u32 %v428, 4294901760
    %430 = vmatpush1.msra.mxu0 %v429
    %431 = vmatprep.subr.mxu0 0.0
    %v432 = vand.u32 %v95, 4294901760
    %v433 = vsub.f32 %v95, %v432
    %v434 = vand.u32 %v433, 4294901760
    %v435 = vsub.f32 %v433, %v434
    %v436 = vand.u32 %v435, 4294901760
    %437 = vmatpush1.msra.mxu0 %v436
    %v438 = vand.u32 %v99, 4294901760
    %439 = vmatprep.mubr.f32.mxu0 %v438
    %v440 = vand.u32 %v98, 4294901760
    %441 = vmatmul.mubr.f32.gmra.mrb[0].mxu0 %v440
    %v442 = vpop.f32.mrb[0].mxu0
    %v443 = vadd.f32 %v211, %v442
    %v444 = vpop.f32.mrb[0].mxu0
    %445 = vdwg.mxu0
    %446 = vmatprep.subr.mxu0 0.0
    %v447 = vand.u32 %v64, 4294901760
    %v448 = vsub.f32 %v64, %v447
    %449 = vmatpush1.msra.mxu0 %v448
    %450 = vmatprep.subr.mxu0 0.0
    %v451 = vand.u32 %v65, 4294901760
    %v452 = vsub.f32 %v65, %v451
    %453 = vmatpush1.msra.mxu0 %v452
    %454 = vmatprep.subr.mxu0 0.0
    %v455 = vand.u32 %v66, 4294901760
    %v456 = vsub.f32 %v66, %v455
    %457 = vmatpush1.msra.mxu0 %v456
    %458 = vmatprep.subr.mxu0 0.0
    %v459 = vand.u32 %v67, 4294901760
    %v460 = vsub.f32 %v67, %v459
    %461 = vmatpush1.msra.mxu0 %v460
    %462 = vmatprep.subr.mxu0 0.0
    %v463 = vand.u32 %v68, 4294901760
    %v464 = vsub.f32 %v68, %v463
    %465 = vmatpush1.msra.mxu0 %v464
    %466 = vmatprep.subr.mxu0 0.0
    %v467 = vand.u32 %v69, 4294901760
    %v468 = vsub.f32 %v69, %v467
    %469 = vmatpush1.msra.mxu0 %v468
    %470 = vmatprep.subr.mxu0 0.0
    %v471 = vand.u32 %v70, 4294901760
    %v472 = vsub.f32 %v70, %v471
    %473 = vmatpush1.msra.mxu0 %v472
    %474 = vmatprep.subr.mxu0 0.0
    %v475 = vand.u32 %v71, 4294901760
    %v476 = vsub.f32 %v71, %v475
    %477 = vmatpush1.msra.mxu0 %v476
    %478 = vmatprep.subr.mxu0 0.0
    %v479 = vand.u32 %v72, 4294901760
    %v480 = vsub.f32 %v72, %v479
    %481 = vmatpush1.msra.mxu0 %v480
    %482 = vmatprep.subr.mxu0 0.0
    %v483 = vand.u32 %v73, 4294901760
    %v484 = vsub.f32 %v73, %v483
    %485 = vmatpush1.msra.mxu0 %v484
    %486 = vmatprep.subr.mxu0 0.0
    %v487 = vand.u32 %v74, 4294901760
    %v488 = vsub.f32 %v74, %v487
    %489 = vmatpush1.msra.mxu0 %v488
    %490 = vmatprep.subr.mxu0 0.0
    %v491 = vand.u32 %v75, 4294901760
    %v492 = vsub.f32 %v75, %v491
    %493 = vmatpush1.msra.mxu0 %v492
    %494 = vmatprep.subr.mxu0 0.0
    %v495 = vand.u32 %v76, 4294901760
    %v496 = vsub.f32 %v76, %v495
    %497 = vmatpush1.msra.mxu0 %v496
    %498 = vmatprep.subr.mxu0 0.0
    %v499 = vand.u32 %v77, 4294901760
    %v500 = vsub.f32 %v77, %v499
    %501 = vmatpush1.msra.mxu0 %v500
    %502 = vmatprep.subr.mxu0 0.0
    %v503 = vand.u32 %v78, 4294901760
    %v504 = vsub.f32 %v78, %v503
    %505 = vmatpush1.msra.mxu0 %v504
    %506 = vmatprep.subr.mxu0 0.0
    %v507 = vand.u32 %v79, 4294901760
    %v508 = vsub.f32 %v79, %v507
    %509 = vmatpush1.msra.mxu0 %v508
    %510 = vmatprep.subr.mxu0 0.0
    %v511 = vand.u32 %v80, 4294901760
    %v512 = vsub.f32 %v80, %v511
    %513 = vmatpush1.msra.mxu0 %v512
    %514 = vmatprep.subr.mxu0 0.0
    %v515 = vand.u32 %v81, 4294901760
    %v516 = vsub.f32 %v81, %v515
    %517 = vmatpush1.msra.mxu0 %v516
    %518 = vmatprep.subr.mxu0 0.0
    %v519 = vand.u32 %v82, 4294901760
    %v520 = vsub.f32 %v82, %v519
    %521 = vmatpush1.msra.mxu0 %v520
    %522 = vmatprep.subr.mxu0 0.0
    %v523 = vand.u32 %v83, 4294901760
    %v524 = vsub.f32 %v83, %v523
    %525 = vmatpush1.msra.mxu0 %v524
    %526 = vmatprep.subr.mxu0 0.0
    %v527 = vand.u32 %v84, 4294901760
    %v528 = vsub.f32 %v84, %v527
    %529 = vmatpush1.msra.mxu0 %v528
    %530 = vmatprep.subr.mxu0 0.0
    %v531 = vand.u32 %v85, 4294901760
    %v532 = vsub.f32 %v85, %v531
    %533 = vmatpush1.msra.mxu0 %v532
    %534 = vmatprep.subr.mxu0 0.0
    %v535 = vand.u32 %v86, 4294901760
    %v536 = vsub.f32 %v86, %v535
    %537 = vmatpush1.msra.mxu0 %v536
    %538 = vmatprep.subr.mxu0 0.0
    %v539 = vand.u32 %v87, 4294901760
    %v540 = vsub.f32 %v87, %v539
    %541 = vmatpush1.msra.mxu0 %v540
    %542 = vmatprep.subr.mxu0 0.0
    %v543 = vand.u32 %v88, 4294901760
    %v544 = vsub.f32 %v88, %v543
    %545 = vmatpush1.msra.mxu0 %v544
    %546 = vmatprep.subr.mxu0 0.0
    %v547 = vand.u32 %v89, 4294901760
    %v548 = vsub.f32 %v89, %v547
    %549 = vmatpush1.msra.mxu0 %v548
    %550 = vmatprep.subr.mxu0 0.0
    %v551 = vand.u32 %v90, 4294901760
    %v552 = vsub.f32 %v90, %v551
    %553 = vmatpush1.msra.mxu0 %v552
    %554 = vmatprep.subr.mxu0 0.0
    %v555 = vand.u32 %v91, 4294901760
    %v556 = vsub.f32 %v91, %v555
    %557 = vmatpush1.msra.mxu0 %v556
    %558 = vmatprep.subr.mxu0 0.0
    %v559 = vand.u32 %v92, 4294901760
    %v560 = vsub.f32 %v92, %v559
    %561 = vmatpush1.msra.mxu0 %v560
    %562 = vmatprep.subr.mxu0 0.0
    %v563 = vand.u32 %v93, 4294901760
    %v564 = vsub.f32 %v93, %v563
    %565 = vmatpush1.msra.mxu0 %v564
    %566 = vmatprep.subr.mxu0 0.0
    %v567 = vand.u32 %v94, 4294901760
    %v568 = vsub.f32 %v94, %v567
    %569 = vmatpush1.msra.mxu0 %v568
    %570 = vmatprep.subr.mxu0 0.0
    %v571 = vand.u32 %v95, 4294901760
    %v572 = vsub.f32 %v95, %v571
    %573 = vmatpush1.msra.mxu0 %v572
    %v574 = vand.u32 %v99, 4294901760
    %v575 = vsub.f32 %v99, %v574
    %576 = vmatprep.mubr.f32.mxu0 %v575
    %v577 = vand.u32 %v98, 4294901760
    %v578 = vsub.f32 %v98, %v577
    %579 = vmatmul.mubr.f32.gmra.mrb[0].mxu0 %v578
    %v580 = vpop.f32.mrb[0].mxu0
    %v581 = vadd.f32 %v443, %v580
    %v582 = vpop.f32.mrb[0].mxu0
    %583 = vdwg.mxu0
    %584 = vmatprep.subr.mxu0 0.0
    %v585 = vand.u32 %v64, 4294901760
    %586 = vmatpush1.msra.mxu0 %v585
    %587 = vmatprep.subr.mxu0 0.0
    %v588 = vand.u32 %v65, 4294901760
    %589 = vmatpush1.msra.mxu0 %v588
    %590 = vmatprep.subr.mxu0 0.0
    %v591 = vand.u32 %v66, 4294901760
    %592 = vmatpush1.msra.mxu0 %v591
    %593 = vmatprep.subr.mxu0 0.0
    %v594 = vand.u32 %v67, 4294901760
    %595 = vmatpush1.msra.mxu0 %v594
    %596 = vmatprep.subr.mxu0 0.0
    %v597 = vand.u32 %v68, 4294901760
    %598 = vmatpush1.msra.mxu0 %v597
    %599 = vmatprep.subr.mxu0 0.0
    %v600 = vand.u32 %v69, 4294901760
    %601 = vmatpush1.msra.mxu0 %v600
    %602 = vmatprep.subr.mxu0 0.0
    %v603 = vand.u32 %v70, 4294901760
    %604 = vmatpush1.msra.mxu0 %v603
    %605 = vmatprep.subr.mxu0 0.0
    %v606 = vand.u32 %v71, 4294901760
    %607 = vmatpush1.msra.mxu0 %v606
    %608 = vmatprep.subr.mxu0 0.0
    %v609 = vand.u32 %v72, 4294901760
    %610 = vmatpush1.msra.mxu0 %v609
    %611 = vmatprep.subr.mxu0 0.0
    %v612 = vand.u32 %v73, 4294901760
    %613 = vmatpush1.msra.mxu0 %v612
    %614 = vmatprep.subr.mxu0 0.0
    %v615 = vand.u32 %v74, 4294901760
    %616 = vmatpush1.msra.mxu0 %v615
    %617 = vmatprep.subr.mxu0 0.0
    %v618 = vand.u32 %v75, 4294901760
    %619 = vmatpush1.msra.mxu0 %v618
    %620 = vmatprep.subr.mxu0 0.0
    %v621 = vand.u32 %v76, 4294901760
    %622 = vmatpush1.msra.mxu0 %v621
    %623 = vmatprep.subr.mxu0 0.0
    %v624 = vand.u32 %v77, 4294901760
    %625 = vmatpush1.msra.mxu0 %v624
    %626 = vmatprep.subr.mxu0 0.0
    %v627 = vand.u32 %v78, 4294901760
    %628 = vmatpush1.msra.mxu0 %v627
    %629 = vmatprep.subr.mxu0 0.0
    %v630 = vand.u32 %v79, 4294901760
    %631 = vmatpush1.msra.mxu0 %v630
    %632 = vmatprep.subr.mxu0 0.0
    %v633 = vand.u32 %v80, 4294901760
    %634 = vmatpush1.msra.mxu0 %v633
    %635 = vmatprep.subr.mxu0 0.0
    %v636 = vand.u32 %v81, 4294901760
    %637 = vmatpush1.msra.mxu0 %v636
    %638 = vmatprep.subr.mxu0 0.0
    %v639 = vand.u32 %v82, 4294901760
    %640 = vmatpush1.msra.mxu0 %v639
    %641 = vmatprep.subr.mxu0 0.0
    %v642 = vand.u32 %v83, 4294901760
    %643 = vmatpush1.msra.mxu0 %v642
    %644 = vmatprep.subr.mxu0 0.0
    %v645 = vand.u32 %v84, 4294901760
    %646 = vmatpush1.msra.mxu0 %v645
    %647 = vmatprep.subr.mxu0 0.0
    %v648 = vand.u32 %v85, 4294901760
    %649 = vmatpush1.msra.mxu0 %v648
    %650 = vmatprep.subr.mxu0 0.0
    %v651 = vand.u32 %v86, 4294901760
    %652 = vmatpush1.msra.mxu0 %v651
    %653 = vmatprep.subr.mxu0 0.0
    %v654 = vand.u32 %v87, 4294901760
    %655 = vmatpush1.msra.mxu0 %v654
    %656 = vmatprep.subr.mxu0 0.0
    %v657 = vand.u32 %v88, 4294901760
    %658 = vmatpush1.msra.mxu0 %v657
    %659 = vmatprep.subr.mxu0 0.0
    %v660 = vand.u32 %v89, 4294901760
    %661 = vmatpush1.msra.mxu0 %v660
    %662 = vmatprep.subr.mxu0 0.0
    %v663 = vand.u32 %v90, 4294901760
    %664 = vmatpush1.msra.mxu0 %v663
    %665 = vmatprep.subr.mxu0 0.0
    %v666 = vand.u32 %v91, 4294901760
    %667 = vmatpush1.msra.mxu0 %v666
    %668 = vmatprep.subr.mxu0 0.0
    %v669 = vand.u32 %v92, 4294901760
    %670 = vmatpush1.msra.mxu0 %v669
    %671 = vmatprep.subr.mxu0 0.0
    %v672 = vand.u32 %v93, 4294901760
    %673 = vmatpush1.msra.mxu0 %v672
    %674 = vmatprep.subr.mxu0 0.0
    %v675 = vand.u32 %v94, 4294901760
    %676 = vmatpush1.msra.mxu0 %v675
    %677 = vmatprep.subr.mxu0 0.0
    %v678 = vand.u32 %v95, 4294901760
    %679 = vmatpush1.msra.mxu0 %v678
    %v680 = vand.u32 %v99, 4294901760
    %v681 = vsub.f32 %v99, %v680
    %v682 = vand.u32 %v681, 4294901760
    %683 = vmatprep.mubr.f32.mxu0 %v682
    %v684 = vand.u32 %v98, 4294901760
    %v685 = vsub.f32 %v98, %v684
    %v686 = vand.u32 %v685, 4294901760
    %687 = vmatmul.mubr.f32.gmra.mrb[0].mxu0 %v686
    %v688 = vpop.f32.mrb[0].mxu0
    %v689 = vadd.f32 %v581, %v688
    %v690 = vpop.f32.mrb[0].mxu0
    %691 = vdwg.mxu0
    %692 = vmatprep.subr.mxu0 0.0
    %v693 = vand.u32 %v64, 4294901760
    %v694 = vsub.f32 %v64, %v693
    %v695 = vand.u32 %v694, 4294901760
    %696 = vmatpush1.msra.mxu0 %v695
    %697 = vmatprep.subr.mxu0 0.0
    %v698 = vand.u32 %v65, 4294901760
    %v699 = vsub.f32 %v65, %v698
    %v700 = vand.u32 %v699, 4294901760
    %701 = vmatpush1.msra.mxu0 %v700
    %702 = vmatprep.subr.mxu0 0.0
    %v703 = vand.u32 %v66, 4294901760
    %v704 = vsub.f32 %v66, %v703
    %v705 = vand.u32 %v704, 4294901760
    %706 = vmatpush1.msra.mxu0 %v705
    %707 = vmatprep.subr.mxu0 0.0
    %v708 = vand.u32 %v67, 4294901760
    %v709 = vsub.f32 %v67, %v708
    %v710 = vand.u32 %v709, 4294901760
    %711 = vmatpush1.msra.mxu0 %v710
    %712 = vmatprep.subr.mxu0 0.0
    %v713 = vand.u32 %v68, 4294901760
    %v714 = vsub.f32 %v68, %v713
    %v715 = vand.u32 %v714, 4294901760
    %716 = vmatpush1.msra.mxu0 %v715
    %717 = vmatprep.subr.mxu0 0.0
    %v718 = vand.u32 %v69, 4294901760
    %v719 = vsub.f32 %v69, %v718
    %v720 = vand.u32 %v719, 4294901760
    %721 = vmatpush1.msra.mxu0 %v720
    %722 = vmatprep.subr.mxu0 0.0
    %v723 = vand.u32 %v70, 4294901760
    %v724 = vsub.f32 %v70, %v723
    %v725 = vand.u32 %v724, 4294901760
    %726 = vmatpush1.msra.mxu0 %v725
    %727 = vmatprep.subr.mxu0 0.0
    %v728 = vand.u32 %v71, 4294901760
    %v729 = vsub.f32 %v71, %v728
    %v730 = vand.u32 %v729, 4294901760
    %731 = vmatpush1.msra.mxu0 %v730
    %732 = vmatprep.subr.mxu0 0.0
    %v733 = vand.u32 %v72, 4294901760
    %v734 = vsub.f32 %v72, %v733
    %v735 = vand.u32 %v734, 4294901760
    %736 = vmatpush1.msra.mxu0 %v735
    %737 = vmatprep.subr.mxu0 0.0
    %v738 = vand.u32 %v73, 4294901760
    %v739 = vsub.f32 %v73, %v738
    %v740 = vand.u32 %v739, 4294901760
    %741 = vmatpush1.msra.mxu0 %v740
    %742 = vmatprep.subr.mxu0 0.0
    %v743 = vand.u32 %v74, 4294901760
    %v744 = vsub.f32 %v74, %v743
    %v745 = vand.u32 %v744, 4294901760
    %746 = vmatpush1.msra.mxu0 %v745
    %747 = vmatprep.subr.mxu0 0.0
    %v748 = vand.u32 %v75, 4294901760
    %v749 = vsub.f32 %v75, %v748
    %v750 = vand.u32 %v749, 4294901760
    %751 = vmatpush1.msra.mxu0 %v750
    %752 = vmatprep.subr.mxu0 0.0
    %v753 = vand.u32 %v76, 4294901760
    %v754 = vsub.f32 %v76, %v753
    %v755 = vand.u32 %v754, 4294901760
    %756 = vmatpush1.msra.mxu0 %v755
    %757 = vmatprep.subr.mxu0 0.0
    %v758 = vand.u32 %v77, 4294901760
    %v759 = vsub.f32 %v77, %v758
    %v760 = vand.u32 %v759, 4294901760
    %761 = vmatpush1.msra.mxu0 %v760
    %762 = vmatprep.subr.mxu0 0.0
    %v763 = vand.u32 %v78, 4294901760
    %v764 = vsub.f32 %v78, %v763
    %v765 = vand.u32 %v764, 4294901760
    %766 = vmatpush1.msra.mxu0 %v765
    %767 = vmatprep.subr.mxu0 0.0
    %v768 = vand.u32 %v79, 4294901760
    %v769 = vsub.f32 %v79, %v768
    %v770 = vand.u32 %v769, 4294901760
    %771 = vmatpush1.msra.mxu0 %v770
    %772 = vmatprep.subr.mxu0 0.0
    %v773 = vand.u32 %v80, 4294901760
    %v774 = vsub.f32 %v80, %v773
    %v775 = vand.u32 %v774, 4294901760
    %776 = vmatpush1.msra.mxu0 %v775
    %777 = vmatprep.subr.mxu0 0.0
    %v778 = vand.u32 %v81, 4294901760
    %v779 = vsub.f32 %v81, %v778
    %v780 = vand.u32 %v779, 4294901760
    %781 = vmatpush1.msra.mxu0 %v780
    %782 = vmatprep.subr.mxu0 0.0
    %v783 = vand.u32 %v82, 4294901760
    %v784 = vsub.f32 %v82, %v783
    %v785 = vand.u32 %v784, 4294901760
    %786 = vmatpush1.msra.mxu0 %v785
    %787 = vmatprep.subr.mxu0 0.0
    %v788 = vand.u32 %v83, 4294901760
    %v789 = vsub.f32 %v83, %v788
    %v790 = vand.u32 %v789, 4294901760
    %791 = vmatpush1.msra.mxu0 %v790
    %792 = vmatprep.subr.mxu0 0.0
    %v793 = vand.u32 %v84, 4294901760
    %v794 = vsub.f32 %v84, %v793
    %v795 = vand.u32 %v794, 4294901760
    %796 = vmatpush1.msra.mxu0 %v795
    %797 = vmatprep.subr.mxu0 0.0
    %v798 = vand.u32 %v85, 4294901760
    %v799 = vsub.f32 %v85, %v798
    %v800 = vand.u32 %v799, 4294901760
    %801 = vmatpush1.msra.mxu0 %v800
    %802 = vmatprep.subr.mxu0 0.0
    %v803 = vand.u32 %v86, 4294901760
    %v804 = vsub.f32 %v86, %v803
    %v805 = vand.u32 %v804, 4294901760
    %806 = vmatpush1.msra.mxu0 %v805
    %807 = vmatprep.subr.mxu0 0.0
    %v808 = vand.u32 %v87, 4294901760
    %v809 = vsub.f32 %v87, %v808
    %v810 = vand.u32 %v809, 4294901760
    %811 = vmatpush1.msra.mxu0 %v810
    %812 = vmatprep.subr.mxu0 0.0
    %v813 = vand.u32 %v88, 4294901760
    %v814 = vsub.f32 %v88, %v813
    %v815 = vand.u32 %v814, 4294901760
    %816 = vmatpush1.msra.mxu0 %v815
    %817 = vmatprep.subr.mxu0 0.0
    %v818 = vand.u32 %v89, 4294901760
    %v819 = vsub.f32 %v89, %v818
    %v820 = vand.u32 %v819, 4294901760
    %821 = vmatpush1.msra.mxu0 %v820
    %822 = vmatprep.subr.mxu0 0.0
    %v823 = vand.u32 %v90, 4294901760
    %v824 = vsub.f32 %v90, %v823
    %v825 = vand.u32 %v824, 4294901760
    %826 = vmatpush1.msra.mxu0 %v825
    %827 = vmatprep.subr.mxu0 0.0
    %v828 = vand.u32 %v91, 4294901760
    %v829 = vsub.f32 %v91, %v828
    %v830 = vand.u32 %v829, 4294901760
    %831 = vmatpush1.msra.mxu0 %v830
    %832 = vmatprep.subr.mxu0 0.0
    %v833 = vand.u32 %v92, 4294901760
    %v834 = vsub.f32 %v92, %v833
    %v835 = vand.u32 %v834, 4294901760
    %836 = vmatpush1.msra.mxu0 %v835
    %837 = vmatprep.subr.mxu0 0.0
    %v838 = vand.u32 %v93, 4294901760
    %v839 = vsub.f32 %v93, %v838
    %v840 = vand.u32 %v839, 4294901760
    %841 = vmatpush1.msra.mxu0 %v840
    %842 = vmatprep.subr.mxu0 0.0
    %v843 = vand.u32 %v94, 4294901760
    %v844 = vsub.f32 %v94, %v843
    %v845 = vand.u32 %v844, 4294901760
    %846 = vmatpush1.msra.mxu0 %v845
    %847 = vmatprep.subr.mxu0 0.0
    %v848 = vand.u32 %v95, 4294901760
    %v849 = vsub.f32 %v95, %v848
    %v850 = vand.u32 %v849, 4294901760
    %851 = vmatpush1.msra.mxu0 %v850
    %v852 = vand.u32 %v99, 4294901760
    %853 = vmatprep.mubr.f32.mxu0 %v852
    %v854 = vand.u32 %v98, 4294901760
    %855 = vmatmul.mubr.f32.gmra.mrb[0].mxu0 %v854
    %v856 = vpop.f32.mrb[0].mxu0
    %v857 = vadd.f32 %v689, %v856
    %v858 = vpop.f32.mrb[0].mxu0
    %859 = vdwg.mxu0
    %860 = vmatprep.subr.mxu0 0.0
    %v861 = vand.u32 %v64, 4294901760
    %862 = vmatpush1.msra.mxu0 %v861
    %863 = vmatprep.subr.mxu0 0.0
    %v864 = vand.u32 %v65, 4294901760
    %865 = vmatpush1.msra.mxu0 %v864
    %866 = vmatprep.subr.mxu0 0.0
    %v867 = vand.u32 %v66, 4294901760
    %868 = vmatpush1.msra.mxu0 %v867
    %869 = vmatprep.subr.mxu0 0.0
    %v870 = vand.u32 %v67, 4294901760
    %871 = vmatpush1.msra.mxu0 %v870
    %872 = vmatprep.subr.mxu0 0.0
    %v873 = vand.u32 %v68, 4294901760
    %874 = vmatpush1.msra.mxu0 %v873
    %875 = vmatprep.subr.mxu0 0.0
    %v876 = vand.u32 %v69, 4294901760
    %877 = vmatpush1.msra.mxu0 %v876
    %878 = vmatprep.subr.mxu0 0.0
    %v879 = vand.u32 %v70, 4294901760
    %880 = vmatpush1.msra.mxu0 %v879
    %881 = vmatprep.subr.mxu0 0.0
    %v882 = vand.u32 %v71, 4294901760
    %883 = vmatpush1.msra.mxu0 %v882
    %884 = vmatprep.subr.mxu0 0.0
    %v885 = vand.u32 %v72, 4294901760
    %886 = vmatpush1.msra.mxu0 %v885
    %887 = vmatprep.subr.mxu0 0.0
    %v888 = vand.u32 %v73, 4294901760
    %889 = vmatpush1.msra.mxu0 %v888
    %890 = vmatprep.subr.mxu0 0.0
    %v891 = vand.u32 %v74, 4294901760
    %892 = vmatpush1.msra.mxu0 %v891
    %893 = vmatprep.subr.mxu0 0.0
    %v894 = vand.u32 %v75, 4294901760
    %895 = vmatpush1.msra.mxu0 %v894
    %896 = vmatprep.subr.mxu0 0.0
    %v897 = vand.u32 %v76, 4294901760
    %898 = vmatpush1.msra.mxu0 %v897
    %899 = vmatprep.subr.mxu0 0.0
    %v900 = vand.u32 %v77, 4294901760
    %901 = vmatpush1.msra.mxu0 %v900
    %902 = vmatprep.subr.mxu0 0.0
    %v903 = vand.u32 %v78, 4294901760
    %904 = vmatpush1.msra.mxu0 %v903
    %905 = vmatprep.subr.mxu0 0.0
    %v906 = vand.u32 %v79, 4294901760
    %907 = vmatpush1.msra.mxu0 %v906
    %908 = vmatprep.subr.mxu0 0.0
    %v909 = vand.u32 %v80, 4294901760
    %910 = vmatpush1.msra.mxu0 %v909
    %911 = vmatprep.subr.mxu0 0.0
    %v912 = vand.u32 %v81, 4294901760
    %913 = vmatpush1.msra.mxu0 %v912
    %914 = vmatprep.subr.mxu0 0.0
    %v915 = vand.u32 %v82, 4294901760
    %916 = vmatpush1.msra.mxu0 %v915
    %917 = vmatprep.subr.mxu0 0.0
    %v918 = vand.u32 %v83, 4294901760
    %919 = vmatpush1.msra.mxu0 %v918
    %920 = vmatprep.subr.mxu0 0.0
    %v921 = vand.u32 %v84, 4294901760
    %922 = vmatpush1.msra.mxu0 %v921
    %923 = vmatprep.subr.mxu0 0.0
    %v924 = vand.u32 %v85, 4294901760
    %925 = vmatpush1.msra.mxu0 %v924
    %926 = vmatprep.subr.mxu0 0.0
    %v927 = vand.u32 %v86, 4294901760
    %928 = vmatpush1.msra.mxu0 %v927
    %929 = vmatprep.subr.mxu0 0.0
    %v930 = vand.u32 %v87, 4294901760
    %931 = vmatpush1.msra.mxu0 %v930
    %932 = vmatprep.subr.mxu0 0.0
    %v933 = vand.u32 %v88, 4294901760
    %934 = vmatpush1.msra.mxu0 %v933
    %935 = vmatprep.subr.mxu0 0.0
    %v936 = vand.u32 %v89, 4294901760
    %937 = vmatpush1.msra.mxu0 %v936
    %938 = vmatprep.subr.mxu0 0.0
    %v939 = vand.u32 %v90, 4294901760
    %940 = vmatpush1.msra.mxu0 %v939
    %941 = vmatprep.subr.mxu0 0.0
    %v942 = vand.u32 %v91, 4294901760
    %943 = vmatpush1.msra.mxu0 %v942
    %944 = vmatprep.subr.mxu0 0.0
    %v945 = vand.u32 %v92, 4294901760
    %946 = vmatpush1.msra.mxu0 %v945
    %947 = vmatprep.subr.mxu0 0.0
    %v948 = vand.u32 %v93, 4294901760
    %949 = vmatpush1.msra.mxu0 %v948
    %950 = vmatprep.subr.mxu0 0.0
    %v951 = vand.u32 %v94, 4294901760
    %952 = vmatpush1.msra.mxu0 %v951
    %953 = vmatprep.subr.mxu0 0.0
    %v954 = vand.u32 %v95, 4294901760
    %955 = vmatpush1.msra.mxu0 %v954
    %v956 = vand.u32 %v99, 4294901760
    %957 = vmatprep.mubr.f32.mxu0 %v956
    %v958 = vand.u32 %v98, 4294901760
    %959 = vmatmul.mubr.f32.gmra.mrb[0].mxu0 %v958
    %v960 = vpop.f32.mrb[0].mxu0
    %v961 = vadd.f32 %v857, %v960
    %v962 = vpop.f32.mrb[0].mxu0
    %963 = vdwg.mxu0
    %v964 = vld [vmem:[#allocation7] sm:$0xff]
    %v965 = vld [vmem:[#allocation7 + $0x8] sm:$0xff]
    %v966 = vld [vmem:[#allocation7 + $0x10] sm:$0xff]
    %v967 = vld [vmem:[#allocation7 + $0x18] sm:$0xff]
    %v968 = vld [vmem:[#allocation7 + $0x20] sm:$0xff]
    %v969 = vld [vmem:[#allocation7 + $0x28] sm:$0xff]
    %v970 = vld [vmem:[#allocation7 + $0x30] sm:$0xff]
    %v971 = vld [vmem:[#allocation7 + $0x38] sm:$0xff]
    %v972 = vld [vmem:[#allocation7 + $0x40] sm:$0xff]
    %v973 = vld [vmem:[#allocation7 + $0x48] sm:$0xff]
    %v974 = vld [vmem:[#allocation7 + $0x50] sm:$0xff]
    %v975 = vld [vmem:[#allocation7 + $0x58] sm:$0xff]
    %v976 = vld [vmem:[#allocation7 + $0x60] sm:$0xff]
    %v977 = vld [vmem:[#allocation7 + $0x68] sm:$0xff]
    %v978 = vld [vmem:[#allocation7 + $0x70] sm:$0xff]
    %v979 = vld [vmem:[#allocation7 + $0x78] sm:$0xff]
    %980 = vmatprep.subr.mxu0 0.0
    %v981 = vand.u32 %v964, 4294901760
    %982 = vmatpush1.msra.mxu0 %v981
    %983 = vmatprep.subr.mxu0 0.0
    %v984 = vand.u32 %v965, 4294901760
    %985 = vmatpush1.msra.mxu0 %v984
    %986 = vmatprep.subr.mxu0 0.0
    %v987 = vand.u32 %v966, 4294901760
    %988 = vmatpush1.msra.mxu0 %v987
    %989 = vmatprep.subr.mxu0 0.0
    %v990 = vand.u32 %v967, 4294901760
    %991 = vmatpush1.msra.mxu0 %v990
    %992 = vmatprep.subr.mxu0 0.0
    %v993 = vand.u32 %v968, 4294901760
    %994 = vmatpush1.msra.mxu0 %v993
    %995 = vmatprep.subr.mxu0 0.0
    %v996 = vand.u32 %v969, 4294901760
    %997 = vmatpush1.msra.mxu0 %v996
    %998 = vmatprep.subr.mxu0 0.0
    %v999 = vand.u32 %v970, 4294901760
    %1000 = vmatpush1.msra.mxu0 %v999
    %1001 = vmatprep.subr.mxu0 0.0
    %v1002 = vand.u32 %v971, 4294901760
    %1003 = vmatpush1.msra.mxu0 %v1002
    %1004 = vmatprep.subr.mxu0 0.0
    %v1005 = vand.u32 %v972, 4294901760
    %1006 = vmatpush1.msra.mxu0 %v1005
    %1007 = vmatprep.subr.mxu0 0.0
    %v1008 = vand.u32 %v973, 4294901760
    %1009 = vmatpush1.msra.mxu0 %v1008
    %1010 = vmatprep.subr.mxu0 0.0
    %v1011 = vand.u32 %v974, 4294901760
    %1012 = vmatpush1.msra.mxu0 %v1011
    %1013 = vmatprep.subr.mxu0 0.0
    %v1014 = vand.u32 %v975, 4294901760
    %1015 = vmatpush1.msra.mxu0 %v1014
    %1016 = vmatprep.subr.mxu0 0.0
    %v1017 = vand.u32 %v976, 4294901760
    %1018 = vmatpush1.msra.mxu0 %v1017
    %1019 = vmatprep.subr.mxu0 0.0
    %v1020 = vand.u32 %v977, 4294901760
    %1021 = vmatpush1.msra.mxu0 %v1020
    %1022 = vmatprep.subr.mxu0 0.0
    %v1023 = vand.u32 %v978, 4294901760
    %1024 = vmatpush1.msra.mxu0 %v1023
    %1025 = vmatprep.subr.mxu0 0.0
    %v1026 = vand.u32 %v979, 4294901760
    %1027 = vmatpush1.msra.mxu0 %v1026
    %1028 = vmatprep.subr.mxu0 0.0
    %1029 = vmatpush1.msra.mxu0 0.0
    %1030 = vmatprep.subr.mxu0 0.0
    %1031 = vmatpush1.msra.mxu0 0.0
    %1032 = vmatprep.subr.mxu0 0.0
    %1033 = vmatpush1.msra.mxu0 0.0
    %1034 = vmatprep.subr.mxu0 0.0
    %1035 = vmatpush1.msra.mxu0 0.0
    %1036 = vmatprep.subr.mxu0 0.0
    %1037 = vmatpush1.msra.mxu0 0.0
    %1038 = vmatprep.subr.mxu0 0.0
    %1039 = vmatpush1.msra.mxu0 0.0
    %1040 = vmatprep.subr.mxu0 0.0
    %1041 = vmatpush1.msra.mxu0 0.0
    %1042 = vmatprep.subr.mxu0 0.0
    %1043 = vmatpush1.msra.mxu0 0.0
    %1044 = vmatprep.subr.mxu0 0.0
    %1045 = vmatpush1.msra.mxu0 0.0
    %1046 = vmatprep.subr.mxu0 0.0
    %1047 = vmatpush1.msra.mxu0 0.0
    %1048 = vmatprep.subr.mxu0 0.0
    %1049 = vmatpush1.msra.mxu0 0.0
    %1050 = vmatprep.subr.mxu0 0.0
    %1051 = vmatpush1.msra.mxu0 0.0
    %1052 = vmatprep.subr.mxu0 0.0
    %1053 = vmatpush1.msra.mxu0 0.0
    %1054 = vmatprep.subr.mxu0 0.0
    %1055 = vmatpush1.msra.mxu0 0.0
    %1056 = vmatprep.subr.mxu0 0.0
    %1057 = vmatpush1.msra.mxu0 0.0
    %1058 = vmatprep.subr.mxu0 0.0
    %1059 = vmatpush1.msra.mxu0 0.0
    %1060 = vmatprep.mubr.f32.mxu0 0.0
    %v1061 = vand.u32 %v961, 4294901760
    %v1062 = vsub.f32 %v961, %v1061
    %v1063 = vand.u32 %v1062, 4294901760
    %v1064 = vsub.f32 %v1062, %v1063
    %v1065 = vand.u32 %v1064, 4294901760
    %1066 = vmatmul.mubr.f32.gmra.mrb[0].mxu0 %v1065
    %v1067 = vpop.f32.mrb[0].mxu0
    %v1068 = vadd.f32 0.0, %v1067
    %v1069 = vpop.f32.mrb[0].mxu0
    %1070 = vdwg.mxu0
    %1071 = vmatprep.subr.mxu0 0.0
    %v1072 = vand.u32 %v964, 4294901760
    %v1073 = vsub.f32 %v964, %v1072
    %v1074 = vand.u32 %v1073, 4294901760
    %v1075 = vsub.f32 %v1073, %v1074
    %v1076 = vand.u32 %v1075, 4294901760
    %1077 = vmatpush1.msra.mxu0 %v1076
    %1078 = vmatprep.subr.mxu0 0.0
    %v1079 = vand.u32 %v965, 4294901760
    %v1080 = vsub.f32 %v965, %v1079
    %v1081 = vand.u32 %v1080, 4294901760
    %v1082 = vsub.f32 %v1080, %v1081
    %v1083 = vand.u32 %v1082, 4294901760
    %1084 = vmatpush1.msra.mxu0 %v1083
    %1085 = vmatprep.subr.mxu0 0.0
    %v1086 = vand.u32 %v966, 4294901760
    %v1087 = vsub.f32 %v966, %v1086
    %v1088 = vand.u32 %v1087, 4294901760
    %v1089 = vsub.f32 %v1087, %v1088
    %v1090 = vand.u32 %v1089, 4294901760
    %1091 = vmatpush1.msra.mxu0 %v1090
    %1092 = vmatprep.subr.mxu0 0.0
    %v1093 = vand.u32 %v967, 4294901760
    %v1094 = vsub.f32 %v967, %v1093
    %v1095 = vand.u32 %v1094, 4294901760
    %v1096 = vsub.f32 %v1094, %v1095
    %v1097 = vand.u32 %v1096, 4294901760
    %1098 = vmatpush1.msra.mxu0 %v1097
    %1099 = vmatprep.subr.mxu0 0.0
    %v1100 = vand.u32 %v968, 4294901760
    %v1101 = vsub.f32 %v968, %v1100
    %v1102 = vand.u32 %v1101, 4294901760
    %v1103 = vsub.f32 %v1101, %v1102
    %v1104 = vand.u32 %v1103, 4294901760
    %1105 = vmatpush1.msra.mxu0 %v1104
    %1106 = vmatprep.subr.mxu0 0.0
    %v1107 = vand.u32 %v969, 4294901760
    %v1108 = vsub.f32 %v969, %v1107
    %v1109 = vand.u32 %v1108, 4294901760
    %v1110 = vsub.f32 %v1108, %v1109
    %v1111 = vand.u32 %v1110, 4294901760
    %1112 = vmatpush1.msra.mxu0 %v1111
    %1113 = vmatprep.subr.mxu0 0.0
    %v1114 = vand.u32 %v970, 4294901760
    %v1115 = vsub.f32 %v970, %v1114
    %v1116 = vand.u32 %v1115, 4294901760
    %v1117 = vsub.f32 %v1115, %v1116
    %v1118 = vand.u32 %v1117, 4294901760
    %1119 = vmatpush1.msra.mxu0 %v1118
    %1120 = vmatprep.subr.mxu0 0.0
    %v1121 = vand.u32 %v971, 4294901760
    %v1122 = vsub.f32 %v971, %v1121
    %v1123 = vand.u32 %v1122, 4294901760
    %v1124 = vsub.f32 %v1122, %v1123
    %v1125 = vand.u32 %v1124, 4294901760
    %1126 = vmatpush1.msra.mxu0 %v1125
    %1127 = vmatprep.subr.mxu0 0.0
    %v1128 = vand.u32 %v972, 4294901760
    %v1129 = vsub.f32 %v972, %v1128
    %v1130 = vand.u32 %v1129, 4294901760
    %v1131 = vsub.f32 %v1129, %v1130
    %v1132 = vand.u32 %v1131, 4294901760
    %1133 = vmatpush1.msra.mxu0 %v1132
    %1134 = vmatprep.subr.mxu0 0.0
    %v1135 = vand.u32 %v973, 4294901760
    %v1136 = vsub.f32 %v973, %v1135
    %v1137 = vand.u32 %v1136, 4294901760
    %v1138 = vsub.f32 %v1136, %v1137
    %v1139 = vand.u32 %v1138, 4294901760
    %1140 = vmatpush1.msra.mxu0 %v1139
    %1141 = vmatprep.subr.mxu0 0.0
    %v1142 = vand.u32 %v974, 4294901760
    %v1143 = vsub.f32 %v974, %v1142
    %v1144 = vand.u32 %v1143, 4294901760
    %v1145 = vsub.f32 %v1143, %v1144
    %v1146 = vand.u32 %v1145, 4294901760
    %1147 = vmatpush1.msra.mxu0 %v1146
    %1148 = vmatprep.subr.mxu0 0.0
    %v1149 = vand.u32 %v975, 4294901760
    %v1150 = vsub.f32 %v975, %v1149
    %v1151 = vand.u32 %v1150, 4294901760
    %v1152 = vsub.f32 %v1150, %v1151
    %v1153 = vand.u32 %v1152, 4294901760
    %1154 = vmatpush1.msra.mxu0 %v1153
    %1155 = vmatprep.subr.mxu0 0.0
    %v1156 = vand.u32 %v976, 4294901760
    %v1157 = vsub.f32 %v976, %v1156
    %v1158 = vand.u32 %v1157, 4294901760
    %v1159 = vsub.f32 %v1157, %v1158
    %v1160 = vand.u32 %v1159, 4294901760
    %1161 = vmatpush1.msra.mxu0 %v1160
    %1162 = vmatprep.subr.mxu0 0.0
    %v1163 = vand.u32 %v977, 4294901760
    %v1164 = vsub.f32 %v977, %v1163
    %v1165 = vand.u32 %v1164, 4294901760
    %v1166 = vsub.f32 %v1164, %v1165
    %v1167 = vand.u32 %v1166, 4294901760
    %1168 = vmatpush1.msra.mxu0 %v1167
    %1169 = vmatprep.subr.mxu0 0.0
    %v1170 = vand.u32 %v978, 4294901760
    %v1171 = vsub.f32 %v978, %v1170
    %v1172 = vand.u32 %v1171, 4294901760
    %v1173 = vsub.f32 %v1171, %v1172
    %v1174 = vand.u32 %v1173, 4294901760
    %1175 = vmatpush1.msra.mxu0 %v1174
    %1176 = vmatprep.subr.mxu0 0.0
    %v1177 = vand.u32 %v979, 4294901760
    %v1178 = vsub.f32 %v979, %v1177
    %v1179 = vand.u32 %v1178, 4294901760
    %v1180 = vsub.f32 %v1178, %v1179
    %v1181 = vand.u32 %v1180, 4294901760
    %1182 = vmatpush1.msra.mxu0 %v1181
    %1183 = vmatprep.subr.mxu0 0.0
    %1184 = vmatpush1.msra.mxu0 0.0
    %1185 = vmatprep.subr.mxu0 0.0
    %1186 = vmatpush1.msra.mxu0 0.0
    %1187 = vmatprep.subr.mxu0 0.0
    %1188 = vmatpush1.msra.mxu0 0.0
    %1189 = vmatprep.subr.mxu0 0.0
    %1190 = vmatpush1.msra.mxu0 0.0
    %1191 = vmatprep.subr.mxu0 0.0
    %1192 = vmatpush1.msra.mxu0 0.0
    %1193 = vmatprep.subr.mxu0 0.0
    %1194 = vmatpush1.msra.mxu0 0.0
    %1195 = vmatprep.subr.mxu0 0.0
    %1196 = vmatpush1.msra.mxu0 0.0
    %1197 = vmatprep.subr.mxu0 0.0
    %1198 = vmatpush1.msra.mxu0 0.0
    %1199 = vmatprep.subr.mxu0 0.0
    %1200 = vmatpush1.msra.mxu0 0.0
    %1201 = vmatprep.subr.mxu0 0.0
    %1202 = vmatpush1.msra.mxu0 0.0
    %1203 = vmatprep.subr.mxu0 0.0
    %1204 = vmatpush1.msra.mxu0 0.0
    %1205 = vmatprep.subr.mxu0 0.0
    %1206 = vmatpush1.msra.mxu0 0.0
    %1207 = vmatprep.subr.mxu0 0.0
    %1208 = vmatpush1.msra.mxu0 0.0
    %1209 = vmatprep.subr.mxu0 0.0
    %1210 = vmatpush1.msra.mxu0 0.0
    %1211 = vmatprep.subr.mxu0 0.0
    %1212 = vmatpush1.msra.mxu0 0.0
    %1213 = vmatprep.subr.mxu0 0.0
    %1214 = vmatpush1.msra.mxu0 0.0
    %1215 = vmatprep.mubr.f32.mxu0 0.0
    %v1216 = vand.u32 %v961, 4294901760
    %1217 = vmatmul.mubr.f32.gmra.mrb[0].mxu0 %v1216
    %v1218 = vpop.f32.mrb[0].mxu0
    %v1219 = vadd.f32 %v1068, %v1218
    %v1220 = vpop.f32.mrb[0].mxu0
    %1221 = vdwg.mxu0
    %1222 = vmatprep.subr.mxu0 0.0
    %v1223 = vand.u32 %v964, 4294901760
    %v1224 = vsub.f32 %v964, %v1223
    %1225 = vmatpush1.msra.mxu0 %v1224
    %1226 = vmatprep.subr.mxu0 0.0
    %v1227 = vand.u32 %v965, 4294901760
    %v1228 = vsub.f32 %v965, %v1227
    %1229 = vmatpush1.msra.mxu0 %v1228
    %1230 = vmatprep.subr.mxu0 0.0
    %v1231 = vand.u32 %v966, 4294901760
    %v1232 = vsub.f32 %v966, %v1231
    %1233 = vmatpush1.msra.mxu0 %v1232
    %1234 = vmatprep.subr.mxu0 0.0
    %v1235 = vand.u32 %v967, 4294901760
    %v1236 = vsub.f32 %v967, %v1235
    %1237 = vmatpush1.msra.mxu0 %v1236
    %1238 = vmatprep.subr.mxu0 0.0
    %v1239 = vand.u32 %v968, 4294901760
    %v1240 = vsub.f32 %v968, %v1239
    %1241 = vmatpush1.msra.mxu0 %v1240
    %1242 = vmatprep.subr.mxu0 0.0
    %v1243 = vand.u32 %v969, 4294901760
    %v1244 = vsub.f32 %v969, %v1243
    %1245 = vmatpush1.msra.mxu0 %v1244
    %1246 = vmatprep.subr.mxu0 0.0
    %v1247 = vand.u32 %v970, 4294901760
    %v1248 = vsub.f32 %v970, %v1247
    %1249 = vmatpush1.msra.mxu0 %v1248
    %1250 = vmatprep.subr.mxu0 0.0
    %v1251 = vand.u32 %v971, 4294901760
    %v1252 = vsub.f32 %v971, %v1251
    %1253 = vmatpush1.msra.mxu0 %v1252
    %1254 = vmatprep.subr.mxu0 0.0
    %v1255 = vand.u32 %v972, 4294901760
    %v1256 = vsub.f32 %v972, %v1255
    %1257 = vmatpush1.msra.mxu0 %v1256
    %1258 = vmatprep.subr.mxu0 0.0
    %v1259 = vand.u32 %v973, 4294901760
    %v1260 = vsub.f32 %v973, %v1259
    %1261 = vmatpush1.msra.mxu0 %v1260
    %1262 = vmatprep.subr.mxu0 0.0
    %v1263 = vand.u32 %v974, 4294901760
    %v1264 = vsub.f32 %v974, %v1263
    %1265 = vmatpush1.msra.mxu0 %v1264
    %1266 = vmatprep.subr.mxu0 0.0
    %v1267 = vand.u32 %v975, 4294901760
    %v1268 = vsub.f32 %v975, %v1267
    %1269 = vmatpush1.msra.mxu0 %v1268
    %1270 = vmatprep.subr.mxu0 0.0
    %v1271 = vand.u32 %v976, 4294901760
    %v1272 = vsub.f32 %v976, %v1271
    %1273 = vmatpush1.msra.mxu0 %v1272
    %1274 = vmatprep.subr.mxu0 0.0
    %v1275 = vand.u32 %v977, 4294901760
    %v1276 = vsub.f32 %v977, %v1275
    %1277 = vmatpush1.msra.mxu0 %v1276
    %1278 = vmatprep.subr.mxu0 0.0
    %v1279 = vand.u32 %v978, 4294901760
    %v1280 = vsub.f32 %v978, %v1279
    %1281 = vmatpush1.msra.mxu0 %v1280
    %1282 = vmatprep.subr.mxu0 0.0
    %v1283 = vand.u32 %v979, 4294901760
    %v1284 = vsub.f32 %v979, %v1283
    %1285 = vmatpush1.msra.mxu0 %v1284
    %1286 = vmatprep.subr.mxu0 0.0
    %1287 = vmatpush1.msra.mxu0 0.0
    %1288 = vmatprep.subr.mxu0 0.0
    %1289 = vmatpush1.msra.mxu0 0.0
    %1290 = vmatprep.subr.mxu0 0.0
    %1291 = vmatpush1.msra.mxu0 0.0
    %1292 = vmatprep.subr.mxu0 0.0
    %1293 = vmatpush1.msra.mxu0 0.0
    %1294 = vmatprep.subr.mxu0 0.0
    %1295 = vmatpush1.msra.mxu0 0.0
    %1296 = vmatprep.subr.mxu0 0.0
    %1297 = vmatpush1.msra.mxu0 0.0
    %1298 = vmatprep.subr.mxu0 0.0
    %1299 = vmatpush1.msra.mxu0 0.0
    %1300 = vmatprep.subr.mxu0 0.0
    %1301 = vmatpush1.msra.mxu0 0.0
    %1302 = vmatprep.subr.mxu0 0.0
    %1303 = vmatpush1.msra.mxu0 0.0
    %1304 = vmatprep.subr.mxu0 0.0
    %1305 = vmatpush1.msra.mxu0 0.0
    %1306 = vmatprep.subr.mxu0 0.0
    %1307 = vmatpush1.msra.mxu0 0.0
    %1308 = vmatprep.subr.mxu0 0.0
    %1309 = vmatpush1.msra.mxu0 0.0
    %1310 = vmatprep.subr.mxu0 0.0
    %1311 = vmatpush1.msra.mxu0 0.0
    %1312 = vmatprep.subr.mxu0 0.0
    %1313 = vmatpush1.msra.mxu0 0.0
    %1314 = vmatprep.subr.mxu0 0.0
    %1315 = vmatpush1.msra.mxu0 0.0
    %1316 = vmatprep.subr.mxu0 0.0
    %1317 = vmatpush1.msra.mxu0 0.0
    %1318 = vmatprep.mubr.f32.mxu0 0.0
    %v1319 = vand.u32 %v961, 4294901760
    %v1320 = vsub.f32 %v961, %v1319
    %1321 = vmatmul.mubr.f32.gmra.mrb[0].mxu0 %v1320
    %v1322 = vpop.f32.mrb[0].mxu0
    %v1323 = vadd.f32 %v1219, %v1322
    %v1324 = vpop.f32.mrb[0].mxu0
    %1325 = vdwg.mxu0
    %1326 = vmatprep.subr.mxu0 0.0
    %v1327 = vand.u32 %v964, 4294901760
    %1328 = vmatpush1.msra.mxu0 %v1327
    %1329 = vmatprep.subr.mxu0 0.0
    %v1330 = vand.u32 %v965, 4294901760
    %1331 = vmatpush1.msra.mxu0 %v1330
    %1332 = vmatprep.subr.mxu0 0.0
    %v1333 = vand.u32 %v966, 4294901760
    %1334 = vmatpush1.msra.mxu0 %v1333
    %1335 = vmatprep.subr.mxu0 0.0
    %v1336 = vand.u32 %v967, 4294901760
    %1337 = vmatpush1.msra.mxu0 %v1336
    %1338 = vmatprep.subr.mxu0 0.0
    %v1339 = vand.u32 %v968, 4294901760
    %1340 = vmatpush1.msra.mxu0 %v1339
    %1341 = vmatprep.subr.mxu0 0.0
    %v1342 = vand.u32 %v969, 4294901760
    %1343 = vmatpush1.msra.mxu0 %v1342
    %1344 = vmatprep.subr.mxu0 0.0
    %v1345 = vand.u32 %v970, 4294901760
    %1346 = vmatpush1.msra.mxu0 %v1345
    %1347 = vmatprep.subr.mxu0 0.0
    %v1348 = vand.u32 %v971, 4294901760
    %1349 = vmatpush1.msra.mxu0 %v1348
    %1350 = vmatprep.subr.mxu0 0.0
    %v1351 = vand.u32 %v972, 4294901760
    %1352 = vmatpush1.msra.mxu0 %v1351
    %1353 = vmatprep.subr.mxu0 0.0
    %v1354 = vand.u32 %v973, 4294901760
    %1355 = vmatpush1.msra.mxu0 %v1354
    %1356 = vmatprep.subr.mxu0 0.0
    %v1357 = vand.u32 %v974, 4294901760
    %1358 = vmatpush1.msra.mxu0 %v1357
    %1359 = vmatprep.subr.mxu0 0.0
    %v1360 = vand.u32 %v975, 4294901760
    %1361 = vmatpush1.msra.mxu0 %v1360
    %1362 = vmatprep.subr.mxu0 0.0
    %v1363 = vand.u32 %v976, 4294901760
    %1364 = vmatpush1.msra.mxu0 %v1363
    %1365 = vmatprep.subr.mxu0 0.0
    %v1366 = vand.u32 %v977, 4294901760
    %1367 = vmatpush1.msra.mxu0 %v1366
    %1368 = vmatprep.subr.mxu0 0.0
    %v1369 = vand.u32 %v978, 4294901760
    %1370 = vmatpush1.msra.mxu0 %v1369
    %1371 = vmatprep.subr.mxu0 0.0
    %v1372 = vand.u32 %v979, 4294901760
    %1373 = vmatpush1.msra.mxu0 %v1372
    %1374 = vmatprep.subr.mxu0 0.0
    %1375 = vmatpush1.msra.mxu0 0.0
    %1376 = vmatprep.subr.mxu0 0.0
    %1377 = vmatpush1.msra.mxu0 0.0
    %1378 = vmatprep.subr.mxu0 0.0
    %1379 = vmatpush1.msra.mxu0 0.0
    %1380 = vmatprep.subr.mxu0 0.0
    %1381 = vmatpush1.msra.mxu0 0.0
    %1382 = vmatprep.subr.mxu0 0.0
    %1383 = vmatpush1.msra.mxu0 0.0
    %1384 = vmatprep.subr.mxu0 0.0
    %1385 = vmatpush1.msra.mxu0 0.0
    %1386 = vmatprep.subr.mxu0 0.0
    %1387 = vmatpush1.msra.mxu0 0.0
    %1388 = vmatprep.subr.mxu0 0.0
    %1389 = vmatpush1.msra.mxu0 0.0
    %1390 = vmatprep.subr.mxu0 0.0
    %1391 = vmatpush1.msra.mxu0 0.0
    %1392 = vmatprep.subr.mxu0 0.0
    %1393 = vmatpush1.msra.mxu0 0.0
    %1394 = vmatprep.subr.mxu0 0.0
    %1395 = vmatpush1.msra.mxu0 0.0
    %1396 = vmatprep.subr.mxu0 0.0
    %1397 = vmatpush1.msra.mxu0 0.0
    %1398 = vmatprep.subr.mxu0 0.0
    %1399 = vmatpush1.msra.mxu0 0.0
    %1400 = vmatprep.subr.mxu0 0.0
    %1401 = vmatpush1.msra.mxu0 0.0
    %1402 = vmatprep.subr.mxu0 0.0
    %1403 = vmatpush1.msra.mxu0 0.0
    %1404 = vmatprep.subr.mxu0 0.0
    %1405 = vmatpush1.msra.mxu0 0.0
    %1406 = vmatprep.mubr.f32.mxu0 0.0
    %v1407 = vand.u32 %v961, 4294901760
    %v1408 = vsub.f32 %v961, %v1407
    %v1409 = vand.u32 %v1408, 4294901760
    %1410 = vmatmul.mubr.f32.gmra.mrb[0].mxu0 %v1409
    %v1411 = vpop.f32.mrb[0].mxu0
    %v1412 = vadd.f32 %v1323, %v1411
    %v1413 = vpop.f32.mrb[0].mxu0
    %1414 = vdwg.mxu0
    %1415 = vmatprep.subr.mxu0 0.0
    %v1416 = vand.u32 %v964, 4294901760
    %v1417 = vsub.f32 %v964, %v1416
    %v1418 = vand.u32 %v1417, 4294901760
    %1419 = vmatpush1.msra.mxu0 %v1418
    %1420 = vmatprep.subr.mxu0 0.0
    %v1421 = vand.u32 %v965, 4294901760
    %v1422 = vsub.f32 %v965, %v1421
    %v1423 = vand.u32 %v1422, 4294901760
    %1424 = vmatpush1.msra.mxu0 %v1423
    %1425 = vmatprep.subr.mxu0 0.0
    %v1426 = vand.u32 %v966, 4294901760
    %v1427 = vsub.f32 %v966, %v1426
    %v1428 = vand.u32 %v1427, 4294901760
    %1429 = vmatpush1.msra.mxu0 %v1428
    %1430 = vmatprep.subr.mxu0 0.0
    %v1431 = vand.u32 %v967, 4294901760
    %v1432 = vsub.f32 %v967, %v1431
    %v1433 = vand.u32 %v1432, 4294901760
    %1434 = vmatpush1.msra.mxu0 %v1433
    %1435 = vmatprep.subr.mxu0 0.0
    %v1436 = vand.u32 %v968, 4294901760
    %v1437 = vsub.f32 %v968, %v1436
    %v1438 = vand.u32 %v1437, 4294901760
    %1439 = vmatpush1.msra.mxu0 %v1438
    %1440 = vmatprep.subr.mxu0 0.0
    %v1441 = vand.u32 %v969, 4294901760
    %v1442 = vsub.f32 %v969, %v1441
    %v1443 = vand.u32 %v1442, 4294901760
    %1444 = vmatpush1.msra.mxu0 %v1443
    %1445 = vmatprep.subr.mxu0 0.0
    %v1446 = vand.u32 %v970, 4294901760
    %v1447 = vsub.f32 %v970, %v1446
    %v1448 = vand.u32 %v1447, 4294901760
    %1449 = vmatpush1.msra.mxu0 %v1448
    %1450 = vmatprep.subr.mxu0 0.0
    %v1451 = vand.u32 %v971, 4294901760
    %v1452 = vsub.f32 %v971, %v1451
    %v1453 = vand.u32 %v1452, 4294901760
    %1454 = vmatpush1.msra.mxu0 %v1453
    %1455 = vmatprep.subr.mxu0 0.0
    %v1456 = vand.u32 %v972, 4294901760
    %v1457 = vsub.f32 %v972, %v1456
    %v1458 = vand.u32 %v1457, 4294901760
    %1459 = vmatpush1.msra.mxu0 %v1458
    %1460 = vmatprep.subr.mxu0 0.0
    %v1461 = vand.u32 %v973, 4294901760
    %v1462 = vsub.f32 %v973, %v1461
    %v1463 = vand.u32 %v1462, 4294901760
    %1464 = vmatpush1.msra.mxu0 %v1463
    %1465 = vmatprep.subr.mxu0 0.0
    %v1466 = vand.u32 %v974, 4294901760
    %v1467 = vsub.f32 %v974, %v1466
    %v1468 = vand.u32 %v1467, 4294901760
    %1469 = vmatpush1.msra.mxu0 %v1468
    %1470 = vmatprep.subr.mxu0 0.0
    %v1471 = vand.u32 %v975, 4294901760
    %v1472 = vsub.f32 %v975, %v1471
    %v1473 = vand.u32 %v1472, 4294901760
    %1474 = vmatpush1.msra.mxu0 %v1473
    %1475 = vmatprep.subr.mxu0 0.0
    %v1476 = vand.u32 %v976, 4294901760
    %v1477 = vsub.f32 %v976, %v1476
    %v1478 = vand.u32 %v1477, 4294901760
    %1479 = vmatpush1.msra.mxu0 %v1478
    %1480 = vmatprep.subr.mxu0 0.0
    %v1481 = vand.u32 %v977, 4294901760
    %v1482 = vsub.f32 %v977, %v1481
    %v1483 = vand.u32 %v1482, 4294901760
    %1484 = vmatpush1.msra.mxu0 %v1483
    %1485 = vmatprep.subr.mxu0 0.0
    %v1486 = vand.u32 %v978, 4294901760
    %v1487 = vsub.f32 %v978, %v1486
    %v1488 = vand.u32 %v1487, 4294901760
    %1489 = vmatpush1.msra.mxu0 %v1488
    %1490 = vmatprep.subr.mxu0 0.0
    %v1491 = vand.u32 %v979, 4294901760
    %v1492 = vsub.f32 %v979, %v1491
    %v1493 = vand.u32 %v1492, 4294901760
    %1494 = vmatpush1.msra.mxu0 %v1493
    %1495 = vmatprep.subr.mxu0 0.0
    %1496 = vmatpush1.msra.mxu0 0.0
    %1497 = vmatprep.subr.mxu0 0.0
    %1498 = vmatpush1.msra.mxu0 0.0
    %1499 = vmatprep.subr.mxu0 0.0
    %1500 = vmatpush1.msra.mxu0 0.0
    %1501 = vmatprep.subr.mxu0 0.0
    %1502 = vmatpush1.msra.mxu0 0.0
    %1503 = vmatprep.subr.mxu0 0.0
    %1504 = vmatpush1.msra.mxu0 0.0
    %1505 = vmatprep.subr.mxu0 0.0
    %1506 = vmatpush1.msra.mxu0 0.0
    %1507 = vmatprep.subr.mxu0 0.0
    %1508 = vmatpush1.msra.mxu0 0.0
    %1509 = vmatprep.subr.mxu0 0.0
    %1510 = vmatpush1.msra.mxu0 0.0
    %1511 = vmatprep.subr.mxu0 0.0
    %1512 = vmatpush1.msra.mxu0 0.0
    %1513 = vmatprep.subr.mxu0 0.0
    %1514 = vmatpush1.msra.mxu0 0.0
    %1515 = vmatprep.subr.mxu0 0.0
    %1516 = vmatpush1.msra.mxu0 0.0
    %1517 = vmatprep.subr.mxu0 0.0
    %1518 = vmatpush1.msra.mxu0 0.0
    %1519 = vmatprep.subr.mxu0 0.0
    %1520 = vmatpush1.msra.mxu0 0.0
    %1521 = vmatprep.subr.mxu0 0.0
    %1522 = vmatpush1.msra.mxu0 0.0
    %1523 = vmatprep.subr.mxu0 0.0
    %1524 = vmatpush1.msra.mxu0 0.0
    %1525 = vmatprep.subr.mxu0 0.0
    %1526 = vmatpush1.msra.mxu0 0.0
    %1527 = vmatprep.mubr.f32.mxu0 0.0
    %v1528 = vand.u32 %v961, 4294901760
    %1529 = vmatmul.mubr.f32.gmra.mrb[0].mxu0 %v1528
    %v1530 = vpop.f32.mrb[0].mxu0
    %v1531 = vadd.f32 %v1412, %v1530
    %v1532 = vpop.f32.mrb[0].mxu0
    %1533 = vdwg.mxu0
    %1534 = vmatprep.subr.mxu0 0.0
    %v1535 = vand.u32 %v964, 4294901760
    %1536 = vmatpush1.msra.mxu0 %v1535
    %1537 = vmatprep.subr.mxu0 0.0
    %v1538 = vand.u32 %v965, 4294901760
    %1539 = vmatpush1.msra.mxu0 %v1538
    %1540 = vmatprep.subr.mxu0 0.0
    %v1541 = vand.u32 %v966, 4294901760
    %1542 = vmatpush1.msra.mxu0 %v1541
    %1543 = vmatprep.subr.mxu0 0.0
    %v1544 = vand.u32 %v967, 4294901760
    %1545 = vmatpush1.msra.mxu0 %v1544
    %1546 = vmatprep.subr.mxu0 0.0
    %v1547 = vand.u32 %v968, 4294901760
    %1548 = vmatpush1.msra.mxu0 %v1547
    %1549 = vmatprep.subr.mxu0 0.0
    %v1550 = vand.u32 %v969, 4294901760
    %1551 = vmatpush1.msra.mxu0 %v1550
    %1552 = vmatprep.subr.mxu0 0.0
    %v1553 = vand.u32 %v970, 4294901760
    %1554 = vmatpush1.msra.mxu0 %v1553
    %1555 = vmatprep.subr.mxu0 0.0
    %v1556 = vand.u32 %v971, 4294901760
    %1557 = vmatpush1.msra.mxu0 %v1556
    %1558 = vmatprep.subr.mxu0 0.0
    %v1559 = vand.u32 %v972, 4294901760
    %1560 = vmatpush1.msra.mxu0 %v1559
    %1561 = vmatprep.subr.mxu0 0.0
    %v1562 = vand.u32 %v973, 4294901760
    %1563 = vmatpush1.msra.mxu0 %v1562
    %1564 = vmatprep.subr.mxu0 0.0
    %v1565 = vand.u32 %v974, 4294901760
    %1566 = vmatpush1.msra.mxu0 %v1565
    %1567 = vmatprep.subr.mxu0 0.0
    %v1568 = vand.u32 %v975, 4294901760
    %1569 = vmatpush1.msra.mxu0 %v1568
    %1570 = vmatprep.subr.mxu0 0.0
    %v1571 = vand.u32 %v976, 4294901760
    %1572 = vmatpush1.msra.mxu0 %v1571
    %1573 = vmatprep.subr.mxu0 0.0
    %v1574 = vand.u32 %v977, 4294901760
    %1575 = vmatpush1.msra.mxu0 %v1574
    %1576 = vmatprep.subr.mxu0 0.0
    %v1577 = vand.u32 %v978, 4294901760
    %1578 = vmatpush1.msra.mxu0 %v1577
    %1579 = vmatprep.subr.mxu0 0.0
    %v1580 = vand.u32 %v979, 4294901760
    %1581 = vmatpush1.msra.mxu0 %v1580
    %1582 = vmatprep.subr.mxu0 0.0
    %1583 = vmatpush1.msra.mxu0 0.0
    %1584 = vmatprep.subr.mxu0 0.0
    %1585 = vmatpush1.msra.mxu0 0.0
    %1586 = vmatprep.subr.mxu0 0.0
    %1587 = vmatpush1.msra.mxu0 0.0
    %1588 = vmatprep.subr.mxu0 0.0
    %1589 = vmatpush1.msra.mxu0 0.0
    %1590 = vmatprep.subr.mxu0 0.0
    %1591 = vmatpush1.msra.mxu0 0.0
    %1592 = vmatprep.subr.mxu0 0.0
    %1593 = vmatpush1.msra.mxu0 0.0
    %1594 = vmatprep.subr.mxu0 0.0
    %1595 = vmatpush1.msra.mxu0 0.0
    %1596 = vmatprep.subr.mxu0 0.0
    %1597 = vmatpush1.msra.mxu0 0.0
    %1598 = vmatprep.subr.mxu0 0.0
    %1599 = vmatpush1.msra.mxu0 0.0
    %1600 = vmatprep.subr.mxu0 0.0
    %1601 = vmatpush1.msra.mxu0 0.0
    %1602 = vmatprep.subr.mxu0 0.0
    %1603 = vmatpush1.msra.mxu0 0.0
    %1604 = vmatprep.subr.mxu0 0.0
    %1605 = vmatpush1.msra.mxu0 0.0
    %1606 = vmatprep.subr.mxu0 0.0
    %1607 = vmatpush1.msra.mxu0 0.0
    %1608 = vmatprep.subr.mxu0 0.0
    %1609 = vmatpush1.msra.mxu0 0.0
    %1610 = vmatprep.subr.mxu0 0.0
    %1611 = vmatpush1.msra.mxu0 0.0
    %1612 = vmatprep.subr.mxu0 0.0
    %1613 = vmatpush1.msra.mxu0 0.0
    %1614 = vmatprep.mubr.f32.mxu0 0.0
    %v1615 = vand.u32 %v961, 4294901760
    %1616 = vmatmul.mubr.f32.gmra.mrb[0].mxu0 %v1615
    %v1617 = vpop.f32.mrb[0].mxu0
    %v1618 = vadd.f32 %v1531, %v1617
    %v1619 = vpop.f32.mrb[0].mxu0
    %1620 = vdwg.mxu0
    %v1621 = vsub.f32 %v961, %v1618
    %v1622 = vmul.f32 %v1621, %v1621
    %1623 = vmatprep.subr.mxu0 0.0
    %v1624 = vand.u32 %v964, 4294901760
    %1625 = vmatpush1.msra.mxu0 %v1624
    %1626 = vmatprep.subr.mxu0 0.0
    %v1627 = vand.u32 %v965, 4294901760
    %1628 = vmatpush1.msra.mxu0 %v1627
    %1629 = vmatprep.subr.mxu0 0.0
    %v1630 = vand.u32 %v966, 4294901760
    %1631 = vmatpush1.msra.mxu0 %v1630
    %1632 = vmatprep.subr.mxu0 0.0
    %v1633 = vand.u32 %v967, 4294901760
    %1634 = vmatpush1.msra.mxu0 %v1633
    %1635 = vmatprep.subr.mxu0 0.0
    %v1636 = vand.u32 %v968, 4294901760
    %1637 = vmatpush1.msra.mxu0 %v1636
    %1638 = vmatprep.subr.mxu0 0.0
    %v1639 = vand.u32 %v969, 4294901760
    %1640 = vmatpush1.msra.mxu0 %v1639
    %1641 = vmatprep.subr.mxu0 0.0
    %v1642 = vand.u32 %v970, 4294901760
    %1643 = vmatpush1.msra.mxu0 %v1642
    %1644 = vmatprep.subr.mxu0 0.0
    %v1645 = vand.u32 %v971, 4294901760
    %1646 = vmatpush1.msra.mxu0 %v1645
    %1647 = vmatprep.subr.mxu0 0.0
    %v1648 = vand.u32 %v972, 4294901760
    %1649 = vmatpush1.msra.mxu0 %v1648
    %1650 = vmatprep.subr.mxu0 0.0
    %v1651 = vand.u32 %v973, 4294901760
    %1652 = vmatpush1.msra.mxu0 %v1651
    %1653 = vmatprep.subr.mxu0 0.0
    %v1654 = vand.u32 %v974, 4294901760
    %1655 = vmatpush1.msra.mxu0 %v1654
    %1656 = vmatprep.subr.mxu0 0.0
    %v1657 = vand.u32 %v975, 4294901760
    %1658 = vmatpush1.msra.mxu0 %v1657
    %1659 = vmatprep.subr.mxu0 0.0
    %v1660 = vand.u32 %v976, 4294901760
    %1661 = vmatpush1.msra.mxu0 %v1660
    %1662 = vmatprep.subr.mxu0 0.0
    %v1663 = vand.u32 %v977, 4294901760
    %1664 = vmatpush1.msra.mxu0 %v1663
    %1665 = vmatprep.subr.mxu0 0.0
    %v1666 = vand.u32 %v978, 4294901760
    %1667 = vmatpush1.msra.mxu0 %v1666
    %1668 = vmatprep.subr.mxu0 0.0
    %v1669 = vand.u32 %v979, 4294901760
    %1670 = vmatpush1.msra.mxu0 %v1669
    %1671 = vmatprep.subr.mxu0 0.0
    %1672 = vmatpush1.msra.mxu0 0.0
    %1673 = vmatprep.subr.mxu0 0.0
    %1674 = vmatpush1.msra.mxu0 0.0
    %1675 = vmatprep.subr.mxu0 0.0
    %1676 = vmatpush1.msra.mxu0 0.0
    %1677 = vmatprep.subr.mxu0 0.0
    %1678 = vmatpush1.msra.mxu0 0.0
    %1679 = vmatprep.subr.mxu0 0.0
    %1680 = vmatpush1.msra.mxu0 0.0
    %1681 = vmatprep.subr.mxu0 0.0
    %1682 = vmatpush1.msra.mxu0 0.0
    %1683 = vmatprep.subr.mxu0 0.0
    %1684 = vmatpush1.msra.mxu0 0.0
    %1685 = vmatprep.subr.mxu0 0.0
    %1686 = vmatpush1.msra.mxu0 0.0
    %1687 = vmatprep.subr.mxu0 0.0
    %1688 = vmatpush1.msra.mxu0 0.0
    %1689 = vmatprep.subr.mxu0 0.0
    %1690 = vmatpush1.msra.mxu0 0.0
    %1691 = vmatprep.subr.mxu0 0.0
    %1692 = vmatpush1.msra.mxu0 0.0
    %1693 = vmatprep.subr.mxu0 0.0
    %1694 = vmatpush1.msra.mxu0 0.0
    %1695 = vmatprep.subr.mxu0 0.0
    %1696 = vmatpush1.msra.mxu0 0.0
    %1697 = vmatprep.subr.mxu0 0.0
    %1698 = vmatpush1.msra.mxu0 0.0
    %1699 = vmatprep.subr.mxu0 0.0
    %1700 = vmatpush1.msra.mxu0 0.0
    %1701 = vmatprep.subr.mxu0 0.0
    %1702 = vmatpush1.msra.mxu0 0.0
    %1703 = vmatprep.mubr.f32.mxu0 0.0
    %v1704 = vand.u32 %v1622, 4294901760
    %v1705 = vsub.f32 %v1622, %v1704
    %v1706 = vand.u32 %v1705, 4294901760
    %v1707 = vsub.f32 %v1705, %v1706
    %v1708 = vand.u32 %v1707, 4294901760
    %1709 = vmatmul.mubr.f32.gmra.mrb[0].mxu0 %v1708
    %v1710 = vpop.f32.mrb[0].mxu0
    %v1711 = vadd.f32 1e-05, %v1710
    %v1712 = vpop.f32.mrb[0].mxu0
    %1713 = vdwg.mxu0
    %1714 = vmatprep.subr.mxu0 0.0
    %v1715 = vand.u32 %v964, 4294901760
    %v1716 = vsub.f32 %v964, %v1715
    %v1717 = vand.u32 %v1716, 4294901760
    %v1718 = vsub.f32 %v1716, %v1717
    %v1719 = vand.u32 %v1718, 4294901760
    %1720 = vmatpush1.msra.mxu0 %v1719
    %1721 = vmatprep.subr.mxu0 0.0
    %v1722 = vand.u32 %v965, 4294901760
    %v1723 = vsub.f32 %v965, %v1722
    %v1724 = vand.u32 %v1723, 4294901760
    %v1725 = vsub.f32 %v1723, %v1724
    %v1726 = vand.u32 %v1725, 4294901760
    %1727 = vmatpush1.msra.mxu0 %v1726
    %1728 = vmatprep.subr.mxu0 0.0
    %v1729 = vand.u32 %v966, 4294901760
    %v1730 = vsub.f32 %v966, %v1729
    %v1731 = vand.u32 %v1730, 4294901760
    %v1732 = vsub.f32 %v1730, %v1731
    %v1733 = vand.u32 %v1732, 4294901760
    %1734 = vmatpush1.msra.mxu0 %v1733
    %1735 = vmatprep.subr.mxu0 0.0
    %v1736 = vand.u32 %v967, 4294901760
    %v1737 = vsub.f32 %v967, %v1736
    %v1738 = vand.u32 %v1737, 4294901760
    %v1739 = vsub.f32 %v1737, %v1738
    %v1740 = vand.u32 %v1739, 4294901760
    %1741 = vmatpush1.msra.mxu0 %v1740
    %1742 = vmatprep.subr.mxu0 0.0
    %v1743 = vand.u32 %v968, 4294901760
    %v1744 = vsub.f32 %v968, %v1743
    %v1745 = vand.u32 %v1744, 4294901760
    %v1746 = vsub.f32 %v1744, %v1745
    %v1747 = vand.u32 %v1746, 4294901760
    %1748 = vmatpush1.msra.mxu0 %v1747
    %1749 = vmatprep.subr.mxu0 0.0
    %v1750 = vand.u32 %v969, 4294901760
    %v1751 = vsub.f32 %v969, %v1750
    %v1752 = vand.u32 %v1751, 4294901760
    %v1753 = vsub.f32 %v1751, %v1752
    %v1754 = vand.u32 %v1753, 4294901760
    %1755 = vmatpush1.msra.mxu0 %v1754
    %1756 = vmatprep.subr.mxu0 0.0
    %v1757 = vand.u32 %v970, 4294901760
    %v1758 = vsub.f32 %v970, %v1757
    %v1759 = vand.u32 %v1758, 4294901760
    %v1760 = vsub.f32 %v1758, %v1759
    %v1761 = vand.u32 %v1760, 4294901760
    %1762 = vmatpush1.msra.mxu0 %v1761
    %1763 = vmatprep.subr.mxu0 0.0
    %v1764 = vand.u32 %v971, 4294901760
    %v1765 = vsub.f32 %v971, %v1764
    %v1766 = vand.u32 %v1765, 4294901760
    %v1767 = vsub.f32 %v1765, %v1766
    %v1768 = vand.u32 %v1767, 4294901760
    %1769 = vmatpush1.msra.mxu0 %v1768
    %1770 = vmatprep.subr.mxu0 0.0
    %v1771 = vand.u32 %v972, 4294901760
    %v1772 = vsub.f32 %v972, %v1771
    %v1773 = vand.u32 %v1772, 4294901760
    %v1774 = vsub.f32 %v1772, %v1773
    %v1775 = vand.u32 %v1774, 4294901760
    %1776 = vmatpush1.msra.mxu0 %v1775
    %1777 = vmatprep.subr.mxu0 0.0
    %v1778 = vand.u32 %v973, 4294901760
    %v1779 = vsub.f32 %v973, %v1778
    %v1780 = vand.u32 %v1779, 4294901760
    %v1781 = vsub.f32 %v1779, %v1780
    %v1782 = vand.u32 %v1781, 4294901760
    %1783 = vmatpush1.msra.mxu0 %v1782
    %1784 = vmatprep.subr.mxu0 0.0
    %v1785 = vand.u32 %v974, 4294901760
    %v1786 = vsub.f32 %v974, %v1785
    %v1787 = vand.u32 %v1786, 4294901760
    %v1788 = vsub.f32 %v1786, %v1787
    %v1789 = vand.u32 %v1788, 4294901760
    %1790 = vmatpush1.msra.mxu0 %v1789
    %1791 = vmatprep.subr.mxu0 0.0
    %v1792 = vand.u32 %v975, 4294901760
    %v1793 = vsub.f32 %v975, %v1792
    %v1794 = vand.u32 %v1793, 4294901760
    %v1795 = vsub.f32 %v1793, %v1794
    %v1796 = vand.u32 %v1795, 4294901760
    %1797 = vmatpush1.msra.mxu0 %v1796
    %1798 = vmatprep.subr.mxu0 0.0
    %v1799 = vand.u32 %v976, 4294901760
    %v1800 = vsub.f32 %v976, %v1799
    %v1801 = vand.u32 %v1800, 4294901760
    %v1802 = vsub.f32 %v1800, %v1801
    %v1803 = vand.u32 %v1802, 4294901760
    %1804 = vmatpush1.msra.mxu0 %v1803
    %1805 = vmatprep.subr.mxu0 0.0
    %v1806 = vand.u32 %v977, 4294901760
    %v1807 = vsub.f32 %v977, %v1806
    %v1808 = vand.u32 %v1807, 4294901760
    %v1809 = vsub.f32 %v1807, %v1808
    %v1810 = vand.u32 %v1809, 4294901760
    %1811 = vmatpush1.msra.mxu0 %v1810
    %1812 = vmatprep.subr.mxu0 0.0
    %v1813 = vand.u32 %v978, 4294901760
    %v1814 = vsub.f32 %v978, %v1813
    %v1815 = vand.u32 %v1814, 4294901760
    %v1816 = vsub.f32 %v1814, %v1815
    %v1817 = vand.u32 %v1816, 4294901760
    %1818 = vmatpush1.msra.mxu0 %v1817
    %1819 = vmatprep.subr.mxu0 0.0
    %v1820 = vand.u32 %v979, 4294901760
    %v1821 = vsub.f32 %v979, %v1820
    %v1822 = vand.u32 %v1821, 4294901760
    %v1823 = vsub.f32 %v1821, %v1822
    %v1824 = vand.u32 %v1823, 4294901760
    %1825 = vmatpush1.msra.mxu0 %v1824
    %1826 = vmatprep.subr.mxu0 0.0
    %1827 = vmatpush1.msra.mxu0 0.0
    %1828 = vmatprep.subr.mxu0 0.0
    %1829 = vmatpush1.msra.mxu0 0.0
    %1830 = vmatprep.subr.mxu0 0.0
    %1831 = vmatpush1.msra.mxu0 0.0
    %1832 = vmatprep.subr.mxu0 0.0
    %1833 = vmatpush1.msra.mxu0 0.0
    %1834 = vmatprep.subr.mxu0 0.0
    %1835 = vmatpush1.msra.mxu0 0.0
    %1836 = vmatprep.subr.mxu0 0.0
    %1837 = vmatpush1.msra.mxu0 0.0
    %1838 = vmatprep.subr.mxu0 0.0
    %1839 = vmatpush1.msra.mxu0 0.0
    %1840 = vmatprep.subr.mxu0 0.0
    %1841 = vmatpush1.msra.mxu0 0.0
    %1842 = vmatprep.subr.mxu0 0.0
    %1843 = vmatpush1.msra.mxu0 0.0
    %1844 = vmatprep.subr.mxu0 0.0
    %1845 = vmatpush1.msra.mxu0 0.0
    %1846 = vmatprep.subr.mxu0 0.0
    %1847 = vmatpush1.msra.mxu0 0.0
    %1848 = vmatprep.subr.mxu0 0.0
    %1849 = vmatpush1.msra.mxu0 0.0
    %1850 = vmatprep.subr.mxu0 0.0
    %1851 = vmatpush1.msra.mxu0 0.0
    %1852 = vmatprep.subr.mxu0 0.0
    %1853 = vmatpush1.msra.mxu0 0.0
    %1854 = vmatprep.subr.mxu0 0.0
    %1855 = vmatpush1.msra.mxu0 0.0
    %1856 = vmatprep.subr.mxu0 0.0
    %1857 = vmatpush1.msra.mxu0 0.0
    %1858 = vmatprep.mubr.f32.mxu0 0.0
    %v1859 = vand.u32 %v1622, 4294901760
    %1860 = vmatmul.mubr.f32.gmra.mrb[0].mxu0 %v1859
    %v1861 = vpop.f32.mrb[0].mxu0
    %v1862 = vadd.f32 %v1711, %v1861
    %v1863 = vpop.f32.mrb[0].mxu0
    %1864 = vdwg.mxu0
    %1865 = vmatprep.subr.mxu0 0.0
    %v1866 = vand.u32 %v964, 4294901760
    %v1867 = vsub.f32 %v964, %v1866
    %1868 = vmatpush1.msra.mxu0 %v1867
    %1869 = vmatprep.subr.mxu0 0.0
    %v1870 = vand.u32 %v965, 4294901760
    %v1871 = vsub.f32 %v965, %v1870
    %1872 = vmatpush1.msra.mxu0 %v1871
    %1873 = vmatprep.subr.mxu0 0.0
    %v1874 = vand.u32 %v966, 4294901760
    %v1875 = vsub.f32 %v966, %v1874
    %1876 = vmatpush1.msra.mxu0 %v1875
    %1877 = vmatprep.subr.mxu0 0.0
    %v1878 = vand.u32 %v967, 4294901760
    %v1879 = vsub.f32 %v967, %v1878
    %1880 = vmatpush1.msra.mxu0 %v1879
    %1881 = vmatprep.subr.mxu0 0.0
    %v1882 = vand.u32 %v968, 4294901760
    %v1883 = vsub.f32 %v968, %v1882
    %1884 = vmatpush1.msra.mxu0 %v1883
    %1885 = vmatprep.subr.mxu0 0.0
    %v1886 = vand.u32 %v969, 4294901760
    %v1887 = vsub.f32 %v969, %v1886
    %1888 = vmatpush1.msra.mxu0 %v1887
    %1889 = vmatprep.subr.mxu0 0.0
    %v1890 = vand.u32 %v970, 4294901760
    %v1891 = vsub.f32 %v970, %v1890
    %1892 = vmatpush1.msra.mxu0 %v1891
    %1893 = vmatprep.subr.mxu0 0.0
    %v1894 = vand.u32 %v971, 4294901760
    %v1895 = vsub.f32 %v971, %v1894
    %1896 = vmatpush1.msra.mxu0 %v1895
    %1897 = vmatprep.subr.mxu0 0.0
    %v1898 = vand.u32 %v972, 4294901760
    %v1899 = vsub.f32 %v972, %v1898
    %1900 = vmatpush1.msra.mxu0 %v1899
    %1901 = vmatprep.subr.mxu0 0.0
    %v1902 = vand.u32 %v973, 4294901760
    %v1903 = vsub.f32 %v973, %v1902
    %1904 = vmatpush1.msra.mxu0 %v1903
    %1905 = vmatprep.subr.mxu0 0.0
    %v1906 = vand.u32 %v974, 4294901760
    %v1907 = vsub.f32 %v974, %v1906
    %1908 = vmatpush1.msra.mxu0 %v1907
    %1909 = vmatprep.subr.mxu0 0.0
    %v1910 = vand.u32 %v975, 4294901760
    %v1911 = vsub.f32 %v975, %v1910
    %1912 = vmatpush1.msra.mxu0 %v1911
    %1913 = vmatprep.subr.mxu0 0.0
    %v1914 = vand.u32 %v976, 4294901760
    %v1915 = vsub.f32 %v976, %v1914
    %1916 = vmatpush1.msra.mxu0 %v1915
    %1917 = vmatprep.subr.mxu0 0.0
    %v1918 = vand.u32 %v977, 4294901760
    %v1919 = vsub.f32 %v977, %v1918
    %1920 = vmatpush1.msra.mxu0 %v1919
    %1921 = vmatprep.subr.mxu0 0.0
    %v1922 = vand.u32 %v978, 4294901760
    %v1923 = vsub.f32 %v978, %v1922
    %1924 = vmatpush1.msra.mxu0 %v1923
    %1925 = vmatprep.subr.mxu0 0.0
    %v1926 = vand.u32 %v979, 4294901760
    %v1927 = vsub.f32 %v979, %v1926
    %1928 = vmatpush1.msra.mxu0 %v1927
    %1929 = vmatprep.subr.mxu0 0.0
    %1930 = vmatpush1.msra.mxu0 0.0
    %1931 = vmatprep.subr.mxu0 0.0
    %1932 = vmatpush1.msra.mxu0 0.0
    %1933 = vmatprep.subr.mxu0 0.0
    %1934 = vmatpush1.msra.mxu0 0.0
    %1935 = vmatprep.subr.mxu0 0.0
    %1936 = vmatpush1.msra.mxu0 0.0
    %1937 = vmatprep.subr.mxu0 0.0
    %1938 = vmatpush1.msra.mxu0 0.0
    %1939 = vmatprep.subr.mxu0 0.0
    %1940 = vmatpush1.msra.mxu0 0.0
    %1941 = vmatprep.subr.mxu0 0.0
    %1942 = vmatpush1.msra.mxu0 0.0
    %1943 = vmatprep.subr.mxu0 0.0
    %1944 = vmatpush1.msra.mxu0 0.0
    %1945 = vmatprep.subr.mxu0 0.0
    %1946 = vmatpush1.msra.mxu0 0.0
    %1947 = vmatprep.subr.mxu0 0.0
    %1948 = vmatpush1.msra.mxu0 0.0
    %1949 = vmatprep.subr.mxu0 0.0
    %1950 = vmatpush1.msra.mxu0 0.0
    %1951 = vmatprep.subr.mxu0 0.0
    %1952 = vmatpush1.msra.mxu0 0.0
    %1953 = vmatprep.subr.mxu0 0.0
    %1954 = vmatpush1.msra.mxu0 0.0
    %1955 = vmatprep.subr.mxu0 0.0
    %1956 = vmatpush1.msra.mxu0 0.0
    %1957 = vmatprep.subr.mxu0 0.0
    %1958 = vmatpush1.msra.mxu0 0.0
    %1959 = vmatprep.subr.mxu0 0.0
    %1960 = vmatpush1.msra.mxu0 0.0
    %1961 = vmatprep.mubr.f32.mxu0 0.0
    %v1962 = vand.u32 %v1622, 4294901760
    %v1963 = vsub.f32 %v1622, %v1962
    %1964 = vmatmul.mubr.f32.gmra.mrb[0].mxu0 %v1963
    %v1965 = vpop.f32.mrb[0].mxu0
    %v1966 = vadd.f32 %v1862, %v1965
    %v1967 = vpop.f32.mrb[0].mxu0
    %1968 = vdwg.mxu0
    %1969 = vmatprep.subr.mxu0 0.0
    %v1970 = vand.u32 %v964, 4294901760
    %1971 = vmatpush1.msra.mxu0 %v1970
    %1972 = vmatprep.subr.mxu0 0.0
    %v1973 = vand.u32 %v965, 4294901760
    %1974 = vmatpush1.msra.mxu0 %v1973
    %1975 = vmatprep.subr.mxu0 0.0
    %v1976 = vand.u32 %v966, 4294901760
    %1977 = vmatpush1.msra.mxu0 %v1976
    %1978 = vmatprep.subr.mxu0 0.0
    %v1979 = vand.u32 %v967, 4294901760
    %1980 = vmatpush1.msra.mxu0 %v1979
    %1981 = vmatprep.subr.mxu0 0.0
    %v1982 = vand.u32 %v968, 4294901760
    %1983 = vmatpush1.msra.mxu0 %v1982
    %1984 = vmatprep.subr.mxu0 0.0
    %v1985 = vand.u32 %v969, 4294901760
    %1986 = vmatpush1.msra.mxu0 %v1985
    %1987 = vmatprep.subr.mxu0 0.0
    %v1988 = vand.u32 %v970, 4294901760
    %1989 = vmatpush1.msra.mxu0 %v1988
    %1990 = vmatprep.subr.mxu0 0.0
    %v1991 = vand.u32 %v971, 4294901760
    %1992 = vmatpush1.msra.mxu0 %v1991
    %1993 = vmatprep.subr.mxu0 0.0
    %v1994 = vand.u32 %v972, 4294901760
    %1995 = vmatpush1.msra.mxu0 %v1994
    %1996 = vmatprep.subr.mxu0 0.0
    %v1997 = vand.u32 %v973, 4294901760
    %1998 = vmatpush1.msra.mxu0 %v1997
    %1999 = vmatprep.subr.mxu0 0.0
    %v2000 = vand.u32 %v974, 4294901760
    %2001 = vmatpush1.msra.mxu0 %v2000
    %2002 = vmatprep.subr.mxu0 0.0
    %v2003 = vand.u32 %v975, 4294901760
    %2004 = vmatpush1.msra.mxu0 %v2003
    %2005 = vmatprep.subr.mxu0 0.0
    %v2006 = vand.u32 %v976, 4294901760
    %2007 = vmatpush1.msra.mxu0 %v2006
    %2008 = vmatprep.subr.mxu0 0.0
    %v2009 = vand.u32 %v977, 4294901760
    %2010 = vmatpush1.msra.mxu0 %v2009
    %2011 = vmatprep.subr.mxu0 0.0
    %v2012 = vand.u32 %v978, 4294901760
    %2013 = vmatpush1.msra.mxu0 %v2012
    %2014 = vmatprep.subr.mxu0 0.0
    %v2015 = vand.u32 %v979, 4294901760
    %2016 = vmatpush1.msra.mxu0 %v2015
    %2017 = vmatprep.subr.mxu0 0.0
    %2018 = vmatpush1.msra.mxu0 0.0
    %2019 = vmatprep.subr.mxu0 0.0
    %2020 = vmatpush1.msra.mxu0 0.0
    %2021 = vmatprep.subr.mxu0 0.0
    %2022 = vmatpush1.msra.mxu0 0.0
    %2023 = vmatprep.subr.mxu0 0.0
    %2024 = vmatpush1.msra.mxu0 0.0
    %2025 = vmatprep.subr.mxu0 0.0
    %2026 = vmatpush1.msra.mxu0 0.0
    %2027 = vmatprep.subr.mxu0 0.0
    %2028 = vmatpush1.msra.mxu0 0.0
    %2029 = vmatprep.subr.mxu0 0.0
    %2030 = vmatpush1.msra.mxu0 0.0
    %2031 = vmatprep.subr.mxu0 0.0
    %2032 = vmatpush1.msra.mxu0 0.0
    %2033 = vmatprep.subr.mxu0 0.0
    %2034 = vmatpush1.msra.mxu0 0.0
    %2035 = vmatprep.subr.mxu0 0.0
    %2036 = vmatpush1.msra.mxu0 0.0
    %2037 = vmatprep.subr.mxu0 0.0
    %2038 = vmatpush1.msra.mxu0 0.0
    %2039 = vmatprep.subr.mxu0 0.0
    %2040 = vmatpush1.msra.mxu0 0.0
    %2041 = vmatprep.subr.mxu0 0.0
    %2042 = vmatpush1.msra.mxu0 0.0
    %2043 = vmatprep.subr.mxu0 0.0
    %2044 = vmatpush1.msra.mxu0 0.0
    %2045 = vmatprep.subr.mxu0 0.0
    %2046 = vmatpush1.msra.mxu0 0.0
    %2047 = vmatprep.subr.mxu0 0.0
    %2048 = vmatpush1.msra.mxu0 0.0
    %2049 = vmatprep.mubr.f32.mxu0 0.0
    %v2050 = vand.u32 %v1622, 4294901760
    %v2051 = vsub.f32 %v1622, %v2050
    %v2052 = vand.u32 %v2051, 4294901760
    %2053 = vmatmul.mubr.f32.gmra.mrb[0].mxu0 %v2052
    %v2054 = vpop.f32.mrb[0].mxu0
    %v2055 = vadd.f32 %v1966, %v2054
    %v2056 = vpop.f32.mrb[0].mxu0
    %2057 = vdwg.mxu0
    %2058 = vmatprep.subr.mxu0 0.0
    %v2059 = vand.u32 %v964, 4294901760
    %v2060 = vsub.f32 %v964, %v2059
    %v2061 = vand.u32 %v2060, 4294901760
    %2062 = vmatpush1.msra.mxu0 %v2061
    %2063 = vmatprep.subr.mxu0 0.0
    %v2064 = vand.u32 %v965, 4294901760
    %v2065 = vsub.f32 %v965, %v2064
    %v2066 = vand.u32 %v2065, 4294901760
    %2067 = vmatpush1.msra.mxu0 %v2066
    %2068 = vmatprep.subr.mxu0 0.0
    %v2069 = vand.u32 %v966, 4294901760
    %v2070 = vsub.f32 %v966, %v2069
    %v2071 = vand.u32 %v2070, 4294901760
    %2072 = vmatpush1.msra.mxu0 %v2071
    %2073 = vmatprep.subr.mxu0 0.0
    %v2074 = vand.u32 %v967, 4294901760
    %v2075 = vsub.f32 %v967, %v2074
    %v2076 = vand.u32 %v2075, 4294901760
    %2077 = vmatpush1.msra.mxu0 %v2076
    %2078 = vmatprep.subr.mxu0 0.0
    %v2079 = vand.u32 %v968, 4294901760
    %v2080 = vsub.f32 %v968, %v2079
    %v2081 = vand.u32 %v2080, 4294901760
    %2082 = vmatpush1.msra.mxu0 %v2081
    %2083 = vmatprep.subr.mxu0 0.0
    %v2084 = vand.u32 %v969, 4294901760
    %v2085 = vsub.f32 %v969, %v2084
    %v2086 = vand.u32 %v2085, 4294901760
    %2087 = vmatpush1.msra.mxu0 %v2086
    %2088 = vmatprep.subr.mxu0 0.0
    %v2089 = vand.u32 %v970, 4294901760
    %v2090 = vsub.f32 %v970, %v2089
    %v2091 = vand.u32 %v2090, 4294901760
    %2092 = vmatpush1.msra.mxu0 %v2091
    %2093 = vmatprep.subr.mxu0 0.0
    %v2094 = vand.u32 %v971, 4294901760
    %v2095 = vsub.f32 %v971, %v2094
    %v2096 = vand.u32 %v2095, 4294901760
    %2097 = vmatpush1.msra.mxu0 %v2096
    %2098 = vmatprep.subr.mxu0 0.0
    %v2099 = vand.u32 %v972, 4294901760
    %v2100 = vsub.f32 %v972, %v2099
    %v2101 = vand.u32 %v2100, 4294901760
    %2102 = vmatpush1.msra.mxu0 %v2101
    %2103 = vmatprep.subr.mxu0 0.0
    %v2104 = vand.u32 %v973, 4294901760
    %v2105 = vsub.f32 %v973, %v2104
    %v2106 = vand.u32 %v2105, 4294901760
    %2107 = vmatpush1.msra.mxu0 %v2106
    %2108 = vmatprep.subr.mxu0 0.0
    %v2109 = vand.u32 %v974, 4294901760
    %v2110 = vsub.f32 %v974, %v2109
    %v2111 = vand.u32 %v2110, 4294901760
    %2112 = vmatpush1.msra.mxu0 %v2111
    %2113 = vmatprep.subr.mxu0 0.0
    %v2114 = vand.u32 %v975, 4294901760
    %v2115 = vsub.f32 %v975, %v2114
    %v2116 = vand.u32 %v2115, 4294901760
    %2117 = vmatpush1.msra.mxu0 %v2116
    %2118 = vmatprep.subr.mxu0 0.0
    %v2119 = vand.u32 %v976, 4294901760
    %v2120 = vsub.f32 %v976, %v2119
    %v2121 = vand.u32 %v2120, 4294901760
    %2122 = vmatpush1.msra.mxu0 %v2121
    %2123 = vmatprep.subr.mxu0 0.0
    %v2124 = vand.u32 %v977, 4294901760
    %v2125 = vsub.f32 %v977, %v2124
    %v2126 = vand.u32 %v2125, 4294901760
    %2127 = vmatpush1.msra.mxu0 %v2126
    %2128 = vmatprep.subr.mxu0 0.0
    %v2129 = vand.u32 %v978, 4294901760
    %v2130 = vsub.f32 %v978, %v2129
    %v2131 = vand.u32 %v2130, 4294901760
    %2132 = vmatpush1.msra.mxu0 %v2131
    %2133 = vmatprep.subr.mxu0 0.0
    %v2134 = vand.u32 %v979, 4294901760
    %v2135 = vsub.f32 %v979, %v2134
    %v2136 = vand.u32 %v2135, 4294901760
    %2137 = vmatpush1.msra.mxu0 %v2136
    %2138 = vmatprep.subr.mxu0 0.0
    %2139 = vmatpush1.msra.mxu0 0.0
    %2140 = vmatprep.subr.mxu0 0.0
    %2141 = vmatpush1.msra.mxu0 0.0
    %2142 = vmatprep.subr.mxu0 0.0
    %2143 = vmatpush1.msra.mxu0 0.0
    %2144 = vmatprep.subr.mxu0 0.0
    %2145 = vmatpush1.msra.mxu0 0.0
    %2146 = vmatprep.subr.mxu0 0.0
    %2147 = vmatpush1.msra.mxu0 0.0
    %2148 = vmatprep.subr.mxu0 0.0
    %2149 = vmatpush1.msra.mxu0 0.0
    %2150 = vmatprep.subr.mxu0 0.0
    %2151 = vmatpush1.msra.mxu0 0.0
    %2152 = vmatprep.subr.mxu0 0.0
    %2153 = vmatpush1.msra.mxu0 0.0
    %2154 = vmatprep.subr.mxu0 0.0
    %2155 = vmatpush1.msra.mxu0 0.0
    %2156 = vmatprep.subr.mxu0 0.0
    %2157 = vmatpush1.msra.mxu0 0.0
    %2158 = vmatprep.subr.mxu0 0.0
    %2159 = vmatpush1.msra.mxu0 0.0
    %2160 = vmatprep.subr.mxu0 0.0
    %2161 = vmatpush1.msra.mxu0 0.0
    %2162 = vmatprep.subr.mxu0 0.0
    %2163 = vmatpush1.msra.mxu0 0.0
    %2164 = vmatprep.subr.mxu0 0.0
    %2165 = vmatpush1.msra.mxu0 0.0
    %2166 = vmatprep.subr.mxu0 0.0
    %2167 = vmatpush1.msra.mxu0 0.0
    %2168 = vmatprep.subr.mxu0 0.0
    %2169 = vmatpush1.msra.mxu0 0.0
    %2170 = vmatprep.mubr.f32.mxu0 0.0
    %v2171 = vand.u32 %v1622, 4294901760
    %2172 = vmatmul.mubr.f32.gmra.mrb[0].mxu0 %v2171
    %v2173 = vpop.f32.mrb[0].mxu0
    %v2174 = vadd.f32 %v2055, %v2173
    %v2175 = vpop.f32.mrb[0].mxu0
    %2176 = vdwg.mxu0
    %2177 = vmatprep.subr.mxu0 0.0
    %v2178 = vand.u32 %v964, 4294901760
    %2179 = vmatpush1.msra.mxu0 %v2178
    %2180 = vmatprep.subr.mxu0 0.0
    %v2181 = vand.u32 %v965, 4294901760
    %2182 = vmatpush1.msra.mxu0 %v2181
    %2183 = vmatprep.subr.mxu0 0.0
    %v2184 = vand.u32 %v966, 4294901760
    %2185 = vmatpush1.msra.mxu0 %v2184
    %2186 = vmatprep.subr.mxu0 0.0
    %v2187 = vand.u32 %v967, 4294901760
    %2188 = vmatpush1.msra.mxu0 %v2187
    %2189 = vmatprep.subr.mxu0 0.0
    %v2190 = vand.u32 %v968, 4294901760
    %2191 = vmatpush1.msra.mxu0 %v2190
    %2192 = vmatprep.subr.mxu0 0.0
    %v2193 = vand.u32 %v969, 4294901760
    %2194 = vmatpush1.msra.mxu0 %v2193
    %2195 = vmatprep.subr.mxu0 0.0
    %v2196 = vand.u32 %v970, 4294901760
    %2197 = vmatpush1.msra.mxu0 %v2196
    %2198 = vmatprep.subr.mxu0 0.0
    %v2199 = vand.u32 %v971, 4294901760
    %2200 = vmatpush1.msra.mxu0 %v2199
    %2201 = vmatprep.subr.mxu0 0.0
    %v2202 = vand.u32 %v972, 4294901760
    %2203 = vmatpush1.msra.mxu0 %v2202
    %2204 = vmatprep.subr.mxu0 0.0
    %v2205 = vand.u32 %v973, 4294901760
    %2206 = vmatpush1.msra.mxu0 %v2205
    %2207 = vmatprep.subr.mxu0 0.0
    %v2208 = vand.u32 %v974, 4294901760
    %2209 = vmatpush1.msra.mxu0 %v2208
    %2210 = vmatprep.subr.mxu0 0.0
    %v2211 = vand.u32 %v975, 4294901760
    %2212 = vmatpush1.msra.mxu0 %v2211
    %2213 = vmatprep.subr.mxu0 0.0
    %v2214 = vand.u32 %v976, 4294901760
    %2215 = vmatpush1.msra.mxu0 %v2214
    %2216 = vmatprep.subr.mxu0 0.0
    %v2217 = vand.u32 %v977, 4294901760
    %2218 = vmatpush1.msra.mxu0 %v2217
    %2219 = vmatprep.subr.mxu0 0.0
    %v2220 = vand.u32 %v978, 4294901760
    %2221 = vmatpush1.msra.mxu0 %v2220
    %2222 = vmatprep.subr.mxu0 0.0
    %v2223 = vand.u32 %v979, 4294901760
    %2224 = vmatpush1.msra.mxu0 %v2223
    %2225 = vmatprep.subr.mxu0 0.0
    %2226 = vmatpush1.msra.mxu0 0.0
    %2227 = vmatprep.subr.mxu0 0.0
    %2228 = vmatpush1.msra.mxu0 0.0
    %2229 = vmatprep.subr.mxu0 0.0
    %2230 = vmatpush1.msra.mxu0 0.0
    %2231 = vmatprep.subr.mxu0 0.0
    %2232 = vmatpush1.msra.mxu0 0.0
    %2233 = vmatprep.subr.mxu0 0.0
    %2234 = vmatpush1.msra.mxu0 0.0
    %2235 = vmatprep.subr.mxu0 0.0
    %2236 = vmatpush1.msra.mxu0 0.0
    %2237 = vmatprep.subr.mxu0 0.0
    %2238 = vmatpush1.msra.mxu0 0.0
    %2239 = vmatprep.subr.mxu0 0.0
    %2240 = vmatpush1.msra.mxu0 0.0
    %2241 = vmatprep.subr.mxu0 0.0
    %2242 = vmatpush1.msra.mxu0 0.0
    %2243 = vmatprep.subr.mxu0 0.0
    %2244 = vmatpush1.msra.mxu0 0.0
    %2245 = vmatprep.subr.mxu0 0.0
    %2246 = vmatpush1.msra.mxu0 0.0
    %2247 = vmatprep.subr.mxu0 0.0
    %2248 = vmatpush1.msra.mxu0 0.0
    %2249 = vmatprep.subr.mxu0 0.0
    %2250 = vmatpush1.msra.mxu0 0.0
    %2251 = vmatprep.subr.mxu0 0.0
    %2252 = vmatpush1.msra.mxu0 0.0
    %2253 = vmatprep.subr.mxu0 0.0
    %2254 = vmatpush1.msra.mxu0 0.0
    %2255 = vmatprep.subr.mxu0 0.0
    %2256 = vmatpush1.msra.mxu0 0.0
    %2257 = vmatprep.mubr.f32.mxu0 0.0
    %v2258 = vand.u32 %v1622, 4294901760
    %2259 = vmatmul.mubr.f32.gmra.mrb[0].mxu0 %v2258
    %v2260 = vpop.f32.mrb[0].mxu0
    %v2261 = vadd.f32 %v2174, %v2260
    %v2262 = vpop.f32.mrb[0].mxu0
    %2263 = vdwg.mxu0
    %v2264 = vrsqrt.pop %v2261
    %v2265 = vmul.f32 %v1621, %v2264
    %v2266 = vld [vmem:[%s2] sm:$0x1]
    %v2268 = vlaneseq
    %v2269 = vshrl.u32 %v2268, 7
    %v2270 = vsub.s32 0, %v2269
    %v2271 = vrot.slane %v2266, %v2270
    %v2273 = vmul.f32 %v2265, %v2271
    %v2274 = vld [vmem:[%s3] sm:$0x1]
    %v2276 = vlaneseq
    %v2277 = vshrl.u32 %v2276, 7
    %v2278 = vsub.s32 0, %v2277
    %v2279 = vrot.slane %v2274, %v2278
    %v2281 = vadd.f32 %v2273, %v2279
    %v2282 = vmul.f32 %v2281, 0.5
    %v2283 = vmul.f32 %v2281, 0.70710677
    %v2284 = verf.f32.pop %v2283
    %v2285 = vadd.f32 %v2284, 1.0
    %v2286 = vmul.f32 %v2282, %v2285
    %2287 = vst [vmem:[#allocation8] sm:$0xff] %v2286
    // Predicated region
    $region34: #{custom_network_forward_fused.1} parent=1 // pred_check
      _
    $region35: #{custom_network_forward_fused.1} parent=1 // pred_check_branch
      %2289 = sbr.rel (0) target = $region37
    $region36: #{custom_network_forward_fused.1} parent=1 // pred_region
      %s2291 = ssub.s32 128, 64
      %2292 = vsyncadd [#allocation4], %s2291
      %s2293 = sshll.u32 [#allocation8], 4
      %s2294 = int_to_ptr.vmem [resolvable:$true] %s2293
      %2299 = dma.vmem_to_hbm [thread:$0]  %s2294, 64, %s5, [#allocation4], 64, 64, 4
    $region37: #{custom_network_forward_fused.1} parent=1 // pred_fallthru
      _
    // Predicated region
    $region38: #{custom_network_forward_fused.1} parent=1 // pred_check
      _
    $region39: #{custom_network_forward_fused.1} parent=1 // pred_check_branch
      %2301 = sbr.rel (0) target = $region41
    $region40: #{custom_network_forward_fused.1} parent=1 // pred_region
      %2302 = dma.done [#allocation4], 128
    $region41: #{custom_network_forward_fused.1} parent=1 // pred_fallthru
      _
    %2303 = vsyncpa [#allocation3], 1
    %2304 = vsyncpa [#allocation6], 1
    %2305 = vsyncpa [#allocation4], 1

</llo_original>
